<compile_context>
chip_gen: v7x
topology: tpu7x:2x2x1
jax: 0.10.0
libtpu: 0.0.40
codegen_flags: <defaults>
</compile_context>

<pallas_src>
import functools

import jax
import jax.numpy as jnp
import numpy as np
from jax import lax
from jax.experimental import pallas as pl
from jax.experimental.pallas import tpu as pltpu


def gcn_kernel(n_iterator, gcn_pad,
               x_ref, meta_ref, mpp_ref, wf_ref, emb_ref, out_ref):
    f32 = jnp.float32
    Lp = x_ref.shape[0]
    Kp = emb_ref.shape[0]
    Gp = gcn_pad
    mxu = wf_ref.dtype                       # bf16 (fast) or f32 (exact)

    x = x_ref[...]                           # (Lp, Dp) f32
    meta = meta_ref[...]                     # (Lp, 3) int32
    pp = meta[:, 0:1]                        # unmasked parent positions
    deps = meta[:, 1:2]                      # dependency type ids
    mask = meta[:, 2:3]                      # attention mask
    mpp = mpp_ref[...]                       # (1, Lp) masked parents; pads = -1

    # ---- loop-invariant one-hot operands (exact in bf16: values are 0/1) ----
    iota_lane = lax.broadcasted_iota(jnp.int32, (Lp, Lp), 1)
    iota_sub = lax.broadcasted_iota(jnp.int32, (Lp, Lp), 0)
    gather_m = (pp == iota_lane).astype(mxu)   # gather_m[i, j] = 1 iff parent(i) == j
    adjT_m = (iota_sub == mpp).astype(mxu)     # adjT[j, i]     = 1 iff masked_parent(i) == j

    # ---- fused embedding + bias lookup: one lane-dense f32 MXU pass ----
    iota_k = lax.broadcasted_iota(jnp.int32, (Lp, Kp), 1)
    dep_oh = (deps == iota_k).astype(f32)                         # (Lp, Kp)
    eadd = jnp.dot(dep_oh, emb_ref[...], preferred_element_type=f32)   # (Lp, 3*Gp+128)

    wf = wf_ref[...]                         # (Dp, 3*Gp+128) mxu dtype
    c0, c1, c2, g0 = 0, Gp, 2 * Gp, 3 * Gp   # column bands of the fused layout

    gcn = x
    for _ in range(n_iterator):
        # One fused matmul: loop/child/parent linears + the three 1-wide gates.
        z = jnp.dot(gcn.astype(mxu), wf, preferred_element_type=f32)   # (Lp, Nf)

        loop_gate = jax.nn.sigmoid(z[:, g0 + 0:g0 + 1] + eadd[:, g0 + 0:g0 + 1])
        par_gate = jax.nn.sigmoid(z[:, g0 + 1:g0 + 2] + eadd[:, g0 + 1:g0 + 2])
        child_gate = jax.nn.sigmoid(z[:, g0 + 2:g0 + 3] + eadd[:, g0 + 2:g0 + 3])

        loop_conv = loop_gate * (z[:, c0:c0 + Gp] + eadd[:, c0:c0 + Gp])
        child_mat = child_gate * (z[:, c1:c1 + Gp] + eadd[:, c1:c1 + Gp])

        # parent path: gather AFTER the (already fused) matmul, then add its
        # per-token bias+embedding band.
        par_lin = jnp.dot(gather_m, z[:, c2:c2 + Gp].astype(mxu),
                          preferred_element_type=f32) + eadd[:, c2:c2 + Gp]
        parent_conv = par_gate * par_lin

        # child_conv[j, :] = sum_i adjT[j, i] * child_mat[i, :]
        child_conv = jnp.dot(adjT_m, child_mat.astype(mxu),
                             preferred_element_type=f32)

        gcn = loop_conv + parent_conv + child_conv

    out_ref[...] = gcn * mask.astype(f32)


def gcn_layer_v2_pallas(x, parent_positions, sentence_deps, attention_mask,
                        params, n_iterator=1, mxu_dtype=jnp.bfloat16):
    f32 = jnp.float32
    B, L, D = x.shape
    G = params["loop_w"].shape[1]
    K = params["p_emb_w"].shape[0]

    if n_iterator > 1 and D != G:
        raise ValueError("n_iterator > 1 requires input_size == gcn_size "
                         "(as in the torch module).")

    rup = lambda v, m: (v + m - 1) // m * m
    Lp, Dp, Gp, Kp = rup(L, 8), rup(D, 128), rup(G, 128), rup(K, 128)
    Nf = 3 * Gp + 128                       # fused output width (lane-dense)

    # ---- fused weight: [loop_w | child_w | parent_w | 3 gate columns] ----
    wf = jnp.zeros((Dp, Nf), f32)
    wf = wf.at[:D, 0:G].set(params["loop_w"].astype(f32))
    wf = wf.at[:D, Gp:Gp + G].set(params["child_w"].astype(f32))
    wf = wf.at[:D, 2 * Gp:2 * Gp + G].set(params["parent_w"].astype(f32))
    wf = wf.at[:D, 3 * Gp + 0].set(params["loop_gw"][:, 0].astype(f32))
    wf = wf.at[:D, 3 * Gp + 1].set(params["parent_gw"][:, 0].astype(f32))
    wf = wf.at[:D, 3 * Gp + 2].set(params["child_gw"][:, 0].astype(f32))
    wf = wf.astype(mxu_dtype)

    # ---- fused embedding/bias table (f32, same column layout as wf output) ----
    emb = jnp.zeros((Kp, Nf), f32)
    emb = emb.at[:K, 0:G].set(jnp.broadcast_to(params["loop_b"].astype(f32), (K, G)))
    emb = emb.at[:K, Gp:Gp + G].set((params["c_emb_w"] + params["child_b"]).astype(f32))
    emb = emb.at[:K, 2 * Gp:2 * Gp + G].set((params["p_emb_w"] + params["parent_b"]).astype(f32))
    emb = emb.at[:K, 3 * Gp + 0].set(jnp.full((K,), params["loop_gb"][0, 0], f32))
    emb = emb.at[:K, 3 * Gp + 1].set((params["p_emb_g"] + params["parent_gb"])[:, 0].astype(f32))
    emb = emb.at[:K, 3 * Gp + 2].set((params["c_emb_g"] + params["child_gb"])[:, 0].astype(f32))

    # ---- metadata (packed) and padded activations ----
    pp = parent_positions.astype(jnp.int32)
    deps = sentence_deps.astype(jnp.int32)
    mask = attention_mask.astype(jnp.int32)
    mpp = jnp.where(mask != 0, pp, jnp.zeros_like(pp))

    meta = jnp.zeros((B, Lp, 3), jnp.int32)
    meta = meta.at[:, :L, 0].set(pp)
    meta = meta.at[:, :L, 1].set(deps)
    meta = meta.at[:, :L, 2].set(mask)

    # extra (beyond-L) padded rows get -1 so they never hit the adjacency
    mpp_row = jnp.full((B, 1, Lp), -1, jnp.int32).at[:, 0, :L].set(mpp)

    xp = jnp.zeros((B, Lp, Dp), f32).at[:, :L, :D].set(x.astype(f32))

    # ---- VMEM budget (resident footprint + double buffers, with headroom) ----
    mxu_size = jnp.dtype(mxu_dtype).itemsize
    est_bytes = (
        2 * (Lp * Dp * 4 + Lp * 128 * 4 + 8 * Lp * 4 + Lp * Gp * 4)   # per-batch blocks (dbl-buffered)
        + 2 * (Dp * Nf * mxu_size + Kp * Nf * 4)                      # fused weights (dbl-buffered)
        + 2 * Lp * Lp * mxu_size                                      # gather + adjacency one-hots
        + Lp * Kp * 4 + 3 * Lp * Nf * 4 + 8 * Lp * Gp * 4             # dep_oh, E, Z, band temporaries
    )
    vmem_limit = int(min(max(2 * est_bytes, 32 * 2**20), 100 * 2**20))

    kernel = functools.partial(gcn_kernel, n_iterator, Gp)

    out = pl.pallas_call(
        kernel,
        out_shape=jax.ShapeDtypeStruct((B, Lp, Gp), f32),
        grid=(B,),
        in_specs=[
            pl.BlockSpec((None, Lp, Dp), lambda b: (b, 0, 0)),   # x
            pl.BlockSpec((None, Lp, 3), lambda b: (b, 0, 0)),    # packed pp/deps/mask
            pl.BlockSpec((None, 1, Lp), lambda b: (b, 0, 0)),    # masked-parent row
            pl.BlockSpec((Dp, Nf), lambda b: (0, 0)),            # fused weight
            pl.BlockSpec((Kp, Nf), lambda b: (0, 0)),            # fused embeddings + biases
        ],
        out_specs=pl.BlockSpec((None, Lp, Gp), lambda b: (b, 0, 0)),
        compiler_params=pltpu.CompilerParams(
            dimension_semantics=("parallel",),
            vmem_limit_bytes=vmem_limit),
    )(xp, meta, mpp_row, wf, emb)

    return out[:, :L, :G]


def gcn_layer_v2_ref(x, parent_positions, sentence_deps, attention_mask,
                     params, n_iterator=1):
    """Pure-JAX reference replicating the PyTorch forward pass exactly."""
    B, L, D = x.shape
    pp = parent_positions.astype(jnp.int32)
    deps = sentence_deps.astype(jnp.int32)
    mask = attention_mask.astype(jnp.int32)
    gcn = x.astype(jnp.float32)
    for _ in range(n_iterator):
        par_gcn = jnp.take_along_axis(gcn, pp[:, :, None], axis=1)
        p_emb_g = params["p_emb_g"][deps]
        c_emb_g = params["c_emb_g"][deps]
        p_emb_w = params["p_emb_w"][deps]
        c_emb_w = params["c_emb_w"][deps]
        loop_gate = jax.nn.sigmoid(gcn @ params["loop_gw"] + params["loop_gb"])
        par_gate = jax.nn.sigmoid(gcn @ params["parent_gw"] + params["parent_gb"] + p_emb_g)
        child_gate = jax.nn.sigmoid(gcn @ params["child_gw"] + params["child_gb"] + c_emb_g)
        loop_conv = loop_gate * (gcn @ params["loop_w"] + params["loop_b"])
        parent_conv = par_gate * (par_gcn @ params["parent_w"] + params["parent_b"] + p_emb_w)
        child_mat = child_gate * (gcn @ params["child_w"] + params["child_b"] + c_emb_w)
        mpp = jnp.where(mask != 0, pp, jnp.zeros_like(pp))
        adj = jax.nn.one_hot(mpp, L, dtype=jnp.float32)             # (B, L, L)
        child_conv = jnp.einsum("bij,bid->bjd", adj, child_mat)
        gcn = loop_conv + parent_conv + child_conv
    return gcn * mask[..., None].astype(jnp.float32)


def init_params(key, input_size, gcn_size, dep_count):
    ks = jax.random.split(key, 16)
    n = lambda k, shape: (jax.random.normal(k, shape, jnp.float32) * 0.1)
    return {
        "loop_w": n(ks[0], (input_size, gcn_size)),   "loop_b": n(ks[1], (1, gcn_size)),
        "parent_w": n(ks[2], (input_size, gcn_size)), "parent_b": n(ks[3], (1, gcn_size)),
        "child_w": n(ks[4], (input_size, gcn_size)),  "child_b": n(ks[5], (1, gcn_size)),
        "loop_gw": n(ks[6], (input_size, 1)),   "loop_gb": n(ks[7], (1, 1)),
        "parent_gw": n(ks[8], (input_size, 1)), "parent_gb": n(ks[9], (1, 1)),
        "child_gw": n(ks[10], (input_size, 1)), "child_gb": n(ks[11], (1, 1)),
        "p_emb_w": n(ks[12], (dep_count, gcn_size)),
        "c_emb_w": n(ks[13], (dep_count, gcn_size)),
        "p_emb_g": n(ks[14], (dep_count, 1)),
        "c_emb_g": n(ks[15], (dep_count, 1)),
    }


if __name__ == "__main__":
    B, L, D, G, DEP, N_ITER = 2, 16, 32, 32, 8, 2

    key = jax.random.PRNGKey(0)
    k_x, k_pp, k_dep, k_par = jax.random.split(key, 4)

    x = jax.random.normal(k_x, (B, L, D), jnp.float32)
    parent_positions = jax.random.randint(k_pp, (B, L), 0, L, jnp.int32)
    sentence_deps = jax.random.randint(k_dep, (B, L), 0, DEP, jnp.int32)
    lengths = jnp.array([L, L // 2], jnp.int32)
    attention_mask = (jnp.arange(L)[None, :] < lengths[:, None]).astype(jnp.int32)

    params = init_params(k_par, D, G, DEP)

    ref = jax.block_until_ready(
        gcn_layer_v2_ref(x, parent_positions, sentence_deps, attention_mask,
                         params, n_iterator=N_ITER))
    ref_np = np.asarray(ref)

    # Exact-dtype mode: validates the fusion / padding / adjacency structure tightly.
    out_f32 = jax.block_until_ready(
        gcn_layer_v2_pallas(x, parent_positions, sentence_deps, attention_mask,
                            params, n_iterator=N_ITER, mxu_dtype=jnp.float32))
    np.testing.assert_allclose(np.asarray(out_f32), ref_np, rtol=1e-4, atol=1e-4)

    # Default fast path: bf16 MXU operands, f32 accumulation / elementwise.
    out_bf16 = jax.block_until_ready(
        gcn_layer_v2_pallas(x, parent_positions, sentence_deps, attention_mask,
                            params, n_iterator=N_ITER))
    rel_err = (np.linalg.norm(np.asarray(out_bf16) - ref_np)
               / max(np.linalg.norm(ref_np), 1e-12))
    assert rel_err < 0.08, f"bf16 relative L2 error too large: {rel_err}"

    print("KERNEL_OK")
</pallas_src>

<mosaic_0001>
module attributes {stable_mosaic.version = 11 : i64} {
  func.func @gcn_kernel(%arg0: i32, %arg1: memref<1x16x128xf32, #tpu.memory_space<vmem>>, %arg2: memref<1x16x3xi32, #tpu.memory_space<vmem>>, %arg3: memref<1x1x16xi32, #tpu.memory_space<vmem>>, %arg4: memref<128x512xf32, #tpu.memory_space<vmem>>, %arg5: memref<128x512xf32, #tpu.memory_space<vmem>>, %arg6: memref<1x16x128xf32, #tpu.memory_space<vmem>>) attributes {dimension_semantics = [#tpu.dimension_semantics<parallel>], iteration_bounds = array<i64: 2>, scalar_prefetch = 0 : i64, scratch_operands = 0 : i64, tpu.core_type = #tpu.core_type<tc>, window_params = [{transform_indices = @transform_0, window_bounds = array<i64: 1, 16, 128>}, {transform_indices = @transform_1, window_bounds = array<i64: 1, 16, 3>}, {transform_indices = @transform_2, window_bounds = array<i64: 1, 1, 16>}, {pipeline_mode = #tpu.pipeline_mode<synchronous>, transform_indices = @transform_3, window_bounds = array<i64: 128, 512>}, {pipeline_mode = #tpu.pipeline_mode<synchronous>, transform_indices = @transform_4, window_bounds = array<i64: 128, 512>}, {transform_indices = @transform_5, window_bounds = array<i64: 1, 16, 128>}]} {
    %c0 = arith.constant 0 : index
    %c0_0 = arith.constant 0 : index
    %c0_1 = arith.constant 0 : index
    %0 = vector.load %arg1[%c0, %c0_0, %c0_1] : memref<1x16x128xf32, #tpu.memory_space<vmem>>, vector<1x16x128xf32>
    %1 = vector.shape_cast %0 : vector<1x16x128xf32> to vector<16x128xf32>
    %c0_2 = arith.constant 0 : index
    %c0_3 = arith.constant 0 : index
    %c0_4 = arith.constant 0 : index
    %2 = vector.load %arg2[%c0_2, %c0_3, %c0_4] : memref<1x16x3xi32, #tpu.memory_space<vmem>>, vector<1x16x3xi32>
    %3 = vector.shape_cast %2 : vector<1x16x3xi32> to vector<16x3xi32>
    %4 = vector.extract_strided_slice %3 {offsets = [0, 0], sizes = [16, 1], strides = [1, 1]} : vector<16x3xi32> to vector<16x1xi32>
    %5 = vector.extract_strided_slice %3 {offsets = [0, 1], sizes = [16, 1], strides = [1, 1]} : vector<16x3xi32> to vector<16x1xi32>
    %6 = vector.extract_strided_slice %3 {offsets = [0, 2], sizes = [16, 1], strides = [1, 1]} : vector<16x3xi32> to vector<16x1xi32>
    %c0_5 = arith.constant 0 : index
    %c0_6 = arith.constant 0 : index
    %c0_7 = arith.constant 0 : index
    %7 = vector.load %arg3[%c0_5, %c0_6, %c0_7] : memref<1x1x16xi32, #tpu.memory_space<vmem>>, vector<1x1x16xi32>
    %8 = vector.shape_cast %7 : vector<1x1x16xi32> to vector<1x16xi32>
    %9 = tpu.iota {dimensions = array<i32: 1>} : vector<16x16xi32>
    %10 = tpu.iota {dimensions = array<i32: 0>} : vector<16x16xi32>
    %11 = vector.broadcast %4 : vector<16x1xi32> to vector<16x16xi32>
    %12 = arith.cmpi eq, %11, %9 : vector<16x16xi32>
    %13 = arith.extui %12 : vector<16x16xi1> to vector<16x16xi32>
    %14 = arith.sitofp %13 : vector<16x16xi32> to vector<16x16xf32>
    %15 = vector.broadcast %8 : vector<1x16xi32> to vector<16x16xi32>
    %16 = arith.cmpi eq, %10, %15 : vector<16x16xi32>
    %17 = arith.extui %16 : vector<16x16xi1> to vector<16x16xi32>
    %18 = arith.sitofp %17 : vector<16x16xi32> to vector<16x16xf32>
    %19 = tpu.iota {dimensions = array<i32: 1>} : vector<16x128xi32>
    %20 = vector.broadcast %5 : vector<16x1xi32> to vector<16x128xi32>
    %21 = arith.cmpi eq, %20, %19 : vector<16x128xi32>
    %22 = arith.extui %21 : vector<16x128xi1> to vector<16x128xi32>
    %23 = arith.sitofp %22 : vector<16x128xi32> to vector<16x128xf32>
    %c0_8 = arith.constant 0 : index
    %c0_9 = arith.constant 0 : index
    %24 = vector.load %arg5[%c0_8, %c0_9] : memref<128x512xf32, #tpu.memory_space<vmem>>, vector<128x512xf32>
    %cst = arith.constant dense<0.000000e+00> : vector<16x512xf32>
    %25 = tpu.matmul %23, %24, %cst {dimension_numbers = #tpu.dot_dimension_numbers<[1], [0], [0], [1], [0, 0, 1, 1], [], []>} : vector<16x128xf32>, vector<128x512xf32>, vector<16x512xf32> -> vector<16x512xf32>
    %c0_10 = arith.constant 0 : index
    %c0_11 = arith.constant 0 : index
    %26 = vector.load %arg4[%c0_10, %c0_11] : memref<128x512xf32, #tpu.memory_space<vmem>>, vector<128x512xf32>
    %cst_12 = arith.constant dense<0.000000e+00> : vector<16x512xf32>
    %27 = tpu.matmul %1, %26, %cst_12 {dimension_numbers = #tpu.dot_dimension_numbers<[1], [0], [0], [1], [0, 0, 1, 1], [], []>} : vector<16x128xf32>, vector<128x512xf32>, vector<16x512xf32> -> vector<16x512xf32>
    %28 = vector.extract_strided_slice %27 {offsets = [0, 384], sizes = [16, 1], strides = [1, 1]} : vector<16x512xf32> to vector<16x1xf32>
    %29 = vector.extract_strided_slice %25 {offsets = [0, 384], sizes = [16, 1], strides = [1, 1]} : vector<16x512xf32> to vector<16x1xf32>
    %30 = arith.addf %28, %29 : vector<16x1xf32>
    %31 = arith.negf %30 : vector<16x1xf32>
    %32 = math.exp %31 : vector<16x1xf32>
    %cst_13 = arith.constant 1.000000e+00 : f32
    %33 = vector.broadcast %cst_13 : f32 to vector<16x1xf32>
    %34 = arith.addf %33, %32 : vector<16x1xf32>
    %35 = arith.divf %33, %34 : vector<16x1xf32>
    %36 = vector.extract_strided_slice %27 {offsets = [0, 385], sizes = [16, 1], strides = [1, 1]} : vector<16x512xf32> to vector<16x1xf32>
    %37 = vector.extract_strided_slice %25 {offsets = [0, 385], sizes = [16, 1], strides = [1, 1]} : vector<16x512xf32> to vector<16x1xf32>
    %38 = arith.addf %36, %37 : vector<16x1xf32>
    %39 = arith.negf %38 : vector<16x1xf32>
    %40 = math.exp %39 : vector<16x1xf32>
    %cst_14 = arith.constant 1.000000e+00 : f32
    %41 = vector.broadcast %cst_14 : f32 to vector<16x1xf32>
    %42 = arith.addf %41, %40 : vector<16x1xf32>
    %43 = arith.divf %41, %42 : vector<16x1xf32>
    %44 = vector.extract_strided_slice %27 {offsets = [0, 386], sizes = [16, 1], strides = [1, 1]} : vector<16x512xf32> to vector<16x1xf32>
    %45 = vector.extract_strided_slice %25 {offsets = [0, 386], sizes = [16, 1], strides = [1, 1]} : vector<16x512xf32> to vector<16x1xf32>
    %46 = arith.addf %44, %45 : vector<16x1xf32>
    %47 = arith.negf %46 : vector<16x1xf32>
    %48 = math.exp %47 : vector<16x1xf32>
    %cst_15 = arith.constant 1.000000e+00 : f32
    %49 = vector.broadcast %cst_15 : f32 to vector<16x1xf32>
    %50 = arith.addf %49, %48 : vector<16x1xf32>
    %51 = arith.divf %49, %50 : vector<16x1xf32>
    %52 = vector.extract_strided_slice %27 {offsets = [0, 0], sizes = [16, 128], strides = [1, 1]} : vector<16x512xf32> to vector<16x128xf32>
    %53 = vector.extract_strided_slice %25 {offsets = [0, 0], sizes = [16, 128], strides = [1, 1]} : vector<16x512xf32> to vector<16x128xf32>
    %54 = arith.addf %52, %53 : vector<16x128xf32>
    %55 = vector.broadcast %35 : vector<16x1xf32> to vector<16x128xf32>
    %56 = arith.mulf %55, %54 : vector<16x128xf32>
    %57 = vector.extract_strided_slice %27 {offsets = [0, 128], sizes = [16, 128], strides = [1, 1]} : vector<16x512xf32> to vector<16x128xf32>
    %58 = vector.extract_strided_slice %25 {offsets = [0, 128], sizes = [16, 128], strides = [1, 1]} : vector<16x512xf32> to vector<16x128xf32>
    %59 = arith.addf %57, %58 : vector<16x128xf32>
    %60 = vector.broadcast %51 : vector<16x1xf32> to vector<16x128xf32>
    %61 = arith.mulf %60, %59 : vector<16x128xf32>
    %62 = vector.extract_strided_slice %27 {offsets = [0, 256], sizes = [16, 128], strides = [1, 1]} : vector<16x512xf32> to vector<16x128xf32>
    %cst_16 = arith.constant dense<0.000000e+00> : vector<16x128xf32>
    %63 = tpu.matmul %14, %62, %cst_16 {dimension_numbers = #tpu.dot_dimension_numbers<[1], [0], [0], [1], [0, 0, 1, 1], [], []>} : vector<16x16xf32>, vector<16x128xf32>, vector<16x128xf32> -> vector<16x128xf32>
    %64 = vector.extract_strided_slice %25 {offsets = [0, 256], sizes = [16, 128], strides = [1, 1]} : vector<16x512xf32> to vector<16x128xf32>
    %65 = arith.addf %63, %64 : vector<16x128xf32>
    %66 = vector.broadcast %43 : vector<16x1xf32> to vector<16x128xf32>
    %67 = arith.mulf %66, %65 : vector<16x128xf32>
    %cst_17 = arith.constant dense<0.000000e+00> : vector<16x128xf32>
    %68 = tpu.matmul %18, %61, %cst_17 {dimension_numbers = #tpu.dot_dimension_numbers<[1], [0], [0], [1], [0, 0, 1, 1], [], []>} : vector<16x16xf32>, vector<16x128xf32>, vector<16x128xf32> -> vector<16x128xf32>
    %69 = arith.addf %56, %67 : vector<16x128xf32>
    %70 = arith.addf %69, %68 : vector<16x128xf32>
    %cst_18 = arith.constant dense<0.000000e+00> : vector<16x512xf32>
    %71 = tpu.matmul %70, %26, %cst_18 {dimension_numbers = #tpu.dot_dimension_numbers<[1], [0], [0], [1], [0, 0, 1, 1], [], []>} : vector<16x128xf32>, vector<128x512xf32>, vector<16x512xf32> -> vector<16x512xf32>
    %72 = vector.extract_strided_slice %71 {offsets = [0, 384], sizes = [16, 1], strides = [1, 1]} : vector<16x512xf32> to vector<16x1xf32>
    %73 = vector.extract_strided_slice %25 {offsets = [0, 384], sizes = [16, 1], strides = [1, 1]} : vector<16x512xf32> to vector<16x1xf32>
    %74 = arith.addf %72, %73 : vector<16x1xf32>
    %75 = arith.negf %74 : vector<16x1xf32>
    %76 = math.exp %75 : vector<16x1xf32>
    %cst_19 = arith.constant 1.000000e+00 : f32
    %77 = vector.broadcast %cst_19 : f32 to vector<16x1xf32>
    %78 = arith.addf %77, %76 : vector<16x1xf32>
    %79 = arith.divf %77, %78 : vector<16x1xf32>
    %80 = vector.extract_strided_slice %71 {offsets = [0, 385], sizes = [16, 1], strides = [1, 1]} : vector<16x512xf32> to vector<16x1xf32>
    %81 = vector.extract_strided_slice %25 {offsets = [0, 385], sizes = [16, 1], strides = [1, 1]} : vector<16x512xf32> to vector<16x1xf32>
    %82 = arith.addf %80, %81 : vector<16x1xf32>
    %83 = arith.negf %82 : vector<16x1xf32>
    %84 = math.exp %83 : vector<16x1xf32>
    %cst_20 = arith.constant 1.000000e+00 : f32
    %85 = vector.broadcast %cst_20 : f32 to vector<16x1xf32>
    %86 = arith.addf %85, %84 : vector<16x1xf32>
    %87 = arith.divf %85, %86 : vector<16x1xf32>
    %88 = vector.extract_strided_slice %71 {offsets = [0, 386], sizes = [16, 1], strides = [1, 1]} : vector<16x512xf32> to vector<16x1xf32>
    %89 = vector.extract_strided_slice %25 {offsets = [0, 386], sizes = [16, 1], strides = [1, 1]} : vector<16x512xf32> to vector<16x1xf32>
    %90 = arith.addf %88, %89 : vector<16x1xf32>
    %91 = arith.negf %90 : vector<16x1xf32>
    %92 = math.exp %91 : vector<16x1xf32>
    %cst_21 = arith.constant 1.000000e+00 : f32
    %93 = vector.broadcast %cst_21 : f32 to vector<16x1xf32>
    %94 = arith.addf %93, %92 : vector<16x1xf32>
    %95 = arith.divf %93, %94 : vector<16x1xf32>
    %96 = vector.extract_strided_slice %71 {offsets = [0, 0], sizes = [16, 128], strides = [1, 1]} : vector<16x512xf32> to vector<16x128xf32>
    %97 = vector.extract_strided_slice %25 {offsets = [0, 0], sizes = [16, 128], strides = [1, 1]} : vector<16x512xf32> to vector<16x128xf32>
    %98 = arith.addf %96, %97 : vector<16x128xf32>
    %99 = vector.broadcast %79 : vector<16x1xf32> to vector<16x128xf32>
    %100 = arith.mulf %99, %98 : vector<16x128xf32>
    %101 = vector.extract_strided_slice %71 {offsets = [0, 128], sizes = [16, 128], strides = [1, 1]} : vector<16x512xf32> to vector<16x128xf32>
    %102 = vector.extract_strided_slice %25 {offsets = [0, 128], sizes = [16, 128], strides = [1, 1]} : vector<16x512xf32> to vector<16x128xf32>
    %103 = arith.addf %101, %102 : vector<16x128xf32>
    %104 = vector.broadcast %95 : vector<16x1xf32> to vector<16x128xf32>
    %105 = arith.mulf %104, %103 : vector<16x128xf32>
    %106 = vector.extract_strided_slice %71 {offsets = [0, 256], sizes = [16, 128], strides = [1, 1]} : vector<16x512xf32> to vector<16x128xf32>
    %cst_22 = arith.constant dense<0.000000e+00> : vector<16x128xf32>
    %107 = tpu.matmul %14, %106, %cst_22 {dimension_numbers = #tpu.dot_dimension_numbers<[1], [0], [0], [1], [0, 0, 1, 1], [], []>} : vector<16x16xf32>, vector<16x128xf32>, vector<16x128xf32> -> vector<16x128xf32>
    %108 = vector.extract_strided_slice %25 {offsets = [0, 256], sizes = [16, 128], strides = [1, 1]} : vector<16x512xf32> to vector<16x128xf32>
    %109 = arith.addf %107, %108 : vector<16x128xf32>
    %110 = vector.broadcast %87 : vector<16x1xf32> to vector<16x128xf32>
    %111 = arith.mulf %110, %109 : vector<16x128xf32>
    %cst_23 = arith.constant dense<0.000000e+00> : vector<16x128xf32>
    %112 = tpu.matmul %18, %105, %cst_23 {dimension_numbers = #tpu.dot_dimension_numbers<[1], [0], [0], [1], [0, 0, 1, 1], [], []>} : vector<16x16xf32>, vector<16x128xf32>, vector<16x128xf32> -> vector<16x128xf32>
    %113 = arith.addf %100, %111 : vector<16x128xf32>
    %114 = arith.addf %113, %112 : vector<16x128xf32>
    %115 = arith.sitofp %6 : vector<16x1xi32> to vector<16x1xf32>
    %116 = vector.broadcast %115 : vector<16x1xf32> to vector<16x128xf32>
    %117 = arith.mulf %114, %116 : vector<16x128xf32>
    %c0_24 = arith.constant 0 : index
    %c0_25 = arith.constant 0 : index
    %c0_26 = arith.constant 0 : index
    %118 = vector.load %arg6[%c0_24, %c0_25, %c0_26] : memref<1x16x128xf32, #tpu.memory_space<vmem>>, vector<1x16x128xf32>
    %119 = vector.shape_cast %118 : vector<1x16x128xf32> to vector<16x128xf32>
    %120 = vector.shape_cast %117 : vector<16x128xf32> to vector<1x16x128xf32>
    tpu.vector_store %arg6[%c0_24, %c0_25, %c0_26], %120 {strides = array<i32>} : memref<1x16x128xf32, #tpu.memory_space<vmem>>, vector<1x16x128xf32>,
    return
  }
  func.func @transform_0(%arg0: i32) -> (i32, i32, i32) {
    %c0_i32 = arith.constant 0 : i32
    %c0_i32_0 = arith.constant 0 : i32
    %c0_i32_1 = arith.constant 0 : i32
    return %arg0, %c0_i32, %c0_i32_0 : i32, i32, i32
  }
  func.func @transform_1(%arg0: i32) -> (i32, i32, i32) {
    %c0_i32 = arith.constant 0 : i32
    %c0_i32_0 = arith.constant 0 : i32
    %c0_i32_1 = arith.constant 0 : i32
    return %arg0, %c0_i32, %c0_i32_0 : i32, i32, i32
  }
  func.func @transform_2(%arg0: i32) -> (i32, i32, i32) {
    %c0_i32 = arith.constant 0 : i32
    %c0_i32_0 = arith.constant 0 : i32
    %c0_i32_1 = arith.constant 0 : i32
    return %arg0, %c0_i32, %c0_i32_0 : i32, i32, i32
  }
  func.func @transform_3(%arg0: i32) -> (i32, i32) {
    %c0_i32 = arith.constant 0 : i32
    %c0_i32_0 = arith.constant 0 : i32
    %c0_i32_1 = arith.constant 0 : i32
    return %c0_i32, %c0_i32_0 : i32, i32
  }
  func.func @transform_4(%arg0: i32) -> (i32, i32) {
    %c0_i32 = arith.constant 0 : i32
    %c0_i32_0 = arith.constant 0 : i32
    %c0_i32_1 = arith.constant 0 : i32
    return %c0_i32, %c0_i32_0 : i32, i32
  }
  func.func @transform_5(%arg0: i32) -> (i32, i32, i32) {
    %c0_i32 = arith.constant 0 : i32
    %c0_i32_0 = arith.constant 0 : i32
    %c0_i32_1 = arith.constant 0 : i32
    return %arg0, %c0_i32, %c0_i32_0 : i32, i32, i32
  }
}

</mosaic_0001>

<llo_original>
// kernel: tpu_custom_call.1
$region0: #{tpu_custom_call.1}
  #allocation0 [shape = 'u32[]', space=smem, size = 0x4, offset = 0x4, fixed_abs, tag = 'smem constant byte address 0x4 - core index']
  #allocation1 [shape = 'u32[144,128]{1,0:T(1,128)}', space=vmem, size = 0x12000, scoped, tag = 'internal scratch']
  %s0 = inlined_call_operand.vmem [shape: f32[2,16,128], index: 0, kind: input, shape index: {}]
  %s1 = inlined_call_operand.vmem [shape: s32[2,16,3], index: 1, kind: input, shape index: {}]
  %s2 = inlined_call_operand.vmem [shape: s32[2,1,16], index: 2, kind: input, shape index: {}]
  %s3 = inlined_call_operand.hbm [shape: f32[128,512], index: 3, kind: input, shape index: {}]
  %s4 = inlined_call_operand.hbm [shape: f32[128,512], index: 4, kind: input, shape index: {}]
  %s5 = inlined_call_operand.hbm [shape: f32[2,16,128], index: 5, kind: output, shape index: {}]
  %s6 = sld [smem:[#allocation0]]
  $region61: #{tpu_custom_call.1} parent=0
    _
  %s8 = ssub.s32 1, %s6
  %s9 = scalar_select 0, %s8, %s6
  $region1: #{tpu_custom_call.1} parent=0
    #allocation2 [shape = 'u8[262144]{0}', space=vmem, size = 0x40000, scoped, tag = 'input window, operand 3, single buffered']
    #allocation3 [shape = 's32[2]{0}', space=sflag, size = 0x8, scoped, tag = 'scoped memory for tpu_custom_call.1']
    #allocation4 [shape = 's32[2]{0}', space=sflag, size = 0x8, scoped, tag = 'scoped memory for tpu_custom_call.1']
    #allocation5 [shape = 'u8[262144]{0}', space=vmem, size = 0x40000, scoped, tag = 'input window, operand 4, single buffered']
    #allocation6 [shape = 's32[1]{0}', space=sflag, size = 0x4, scoped, tag = 'scoped memory for tpu_custom_call.1']
    #allocation7 [shape = 'u8[16384]{0}', space=vmem, size = 0x4000, scoped, tag = 'output window, operand 0']
    %10 = vsyncpa [#allocation3], 0
    %11 = vsyncpa [#allocation6], 0
    %12 = vsyncpa [#allocation4], 0
    %s13 = scalar_lea.sflag [#allocation4], 1
    %14 = vsyncpa %s13, 0
    loop: start=0, step=1, limit=4
    $region2: #{tpu_custom_call.1} parent=1 // loop_pre_header
      _
    $region3: #{tpu_custom_call.1} parent=1 // loop_header
      %s16 = sphi 0, %s20
      %p17 = scmp.ge.s32.totalorder %s16, 4
      %s26 = sphi 0, %s28
      %s29 = sphi 0, %s26
      %s30 = sphi 0, %s29
      %s46 = sphi 0, %s30
      %s52 = sphi 0, %s54
      %s55 = sphi 0, %s52
      %s56 = sphi 0, %s55
      %s72 = sphi 0, %s56
      %s78 = sphi 0, %s80
      %s81 = sphi 0, %s78
      %s82 = sphi 0, %s81
      %s98 = sphi 0, %s82
      %s102 = sphi 0, %s102
      %s104 = sphi 0, %s102
      %s105 = sphi 0, %s104
      %s119 = sphi 0, %s105
      %s123 = sphi 0, %s123
      %s125 = sphi 0, %s123
      %s126 = sphi 0, %s125
      %s140 = sphi 0, %s126
      %s146 = sphi 0, %s148
      %s149 = sphi 0, %s146
      %s150 = sphi 0, %s149
      %s166 = sphi 0, %s150
    $region4: #{tpu_custom_call.1} parent=1 // loop_header_branch
      %19 = sbr.rel (%p17) target = $region8
    $region5: #{tpu_custom_call.1} parent=1 // loop_body
      %s21 = ssub.s32 %s16, 1
      %s22 = ssub.s32 %s16, 2
      %s23 = sadd.s32 %s16, 1
      %s24 = ssub.s32 %s16, %s23
      %p25 = scmp.eq.s32.totalorder %s24, 0
      %s27 = sadd.s32 %s26, 1
      %s28 = scalar_select %p25, %s26, %s27
      %p31 = pneg %p25
      %p32 = scmp.eq.s32.totalorder %s16, 1
      %p33 = por %p31, %p32
      %p34 = scmp.ne.s32.totalorder %s26, %s29
      %p35 = scmp.eq.s32.totalorder %s16, 0
      %p36 = por %p34, %p35
      %p37 = scmp.ne.s32.totalorder %s26, %s29
      %p38 = scmp.eq.s32.totalorder %s21, 1
      %p39 = por %p37, %p38
      %p40 = scmp.ne.s32.totalorder %s29, %s30
      %p41 = scmp.eq.s32.totalorder %s21, 0
      %p42 = por %p40, %p41
      %p43 = scmp.ne.s32.totalorder %s29, %s30
      %p44 = scmp.eq.s32.totalorder %s22, 1
      %p45 = por %p43, %p44
      %p47 = scmp.ne.s32.totalorder %s30, %s46
      %p48 = scmp.eq.s32.totalorder %s22, 0
      %p49 = por %p47, %p48
      %s50 = ssub.s32 %s16, %s23
      %p51 = scmp.eq.s32.totalorder %s50, 0
      %s53 = sadd.s32 %s52, 1
      %s54 = scalar_select %p51, %s52, %s53
      %p57 = pneg %p51
      %p58 = scmp.eq.s32.totalorder %s16, 1
      %p59 = por %p57, %p58
      %p60 = scmp.ne.s32.totalorder %s52, %s55
      %p61 = scmp.eq.s32.totalorder %s16, 0
      %p62 = por %p60, %p61
      %p63 = scmp.ne.s32.totalorder %s52, %s55
      %p64 = scmp.eq.s32.totalorder %s21, 1
      %p65 = por %p63, %p64
      %p66 = scmp.ne.s32.totalorder %s55, %s56
      %p67 = scmp.eq.s32.totalorder %s21, 0
      %p68 = por %p66, %p67
      %p69 = scmp.ne.s32.totalorder %s55, %s56
      %p70 = scmp.eq.s32.totalorder %s22, 1
      %p71 = por %p69, %p70
      %p73 = scmp.ne.s32.totalorder %s56, %s72
      %p74 = scmp.eq.s32.totalorder %s22, 0
      %p75 = por %p73, %p74
      %s76 = ssub.s32 %s16, %s23
      %p77 = scmp.eq.s32.totalorder %s76, 0
      %s79 = sadd.s32 %s78, 1
      %s80 = scalar_select %p77, %s78, %s79
      %p83 = pneg %p77
      %p84 = scmp.eq.s32.totalorder %s16, 1
      %p85 = por %p83, %p84
      %p86 = scmp.ne.s32.totalorder %s78, %s81
      %p87 = scmp.eq.s32.totalorder %s16, 0
      %p88 = por %p86, %p87
      %p89 = scmp.ne.s32.totalorder %s78, %s81
      %p90 = scmp.eq.s32.totalorder %s21, 1
      %p91 = por %p89, %p90
      %p92 = scmp.ne.s32.totalorder %s81, %s82
      %p93 = scmp.eq.s32.totalorder %s21, 0
      %p94 = por %p92, %p93
      %p95 = scmp.ne.s32.totalorder %s81, %s82
      %p96 = scmp.eq.s32.totalorder %s22, 1
      %p97 = por %p95, %p96
      %p99 = scmp.ne.s32.totalorder %s82, %s98
      %p100 = scmp.eq.s32.totalorder %s22, 0
      %p101 = por %p99, %p100
      %s103 = sadd.s32 %s102, 1
      %p106 = scmp.eq.s32.totalorder %s16, 1
      %p107 = scmp.ne.s32.totalorder %s102, %s104
      %p108 = scmp.eq.s32.totalorder %s16, 0
      %p109 = por %p107, %p108
      %p110 = scmp.ne.s32.totalorder %s102, %s104
      %p111 = scmp.eq.s32.totalorder %s21, 1
      %p112 = por %p110, %p111
      %p113 = scmp.ne.s32.totalorder %s104, %s105
      %p114 = scmp.eq.s32.totalorder %s21, 0
      %p115 = por %p113, %p114
      %p116 = scmp.ne.s32.totalorder %s104, %s105
      %p117 = scmp.eq.s32.totalorder %s22, 1
      %p118 = por %p116, %p117
      %p120 = scmp.ne.s32.totalorder %s105, %s119
      %p121 = scmp.eq.s32.totalorder %s22, 0
      %p122 = por %p120, %p121
      %s124 = sadd.s32 %s123, 1
      %p127 = scmp.eq.s32.totalorder %s16, 1
      %p128 = scmp.ne.s32.totalorder %s123, %s125
      %p129 = scmp.eq.s32.totalorder %s16, 0
      %p130 = por %p128, %p129
      %p131 = scmp.ne.s32.totalorder %s123, %s125
      %p132 = scmp.eq.s32.totalorder %s21, 1
      %p133 = por %p131, %p132
      %p134 = scmp.ne.s32.totalorder %s125, %s126
      %p135 = scmp.eq.s32.totalorder %s21, 0
      %p136 = por %p134, %p135
      %p137 = scmp.ne.s32.totalorder %s125, %s126
      %p138 = scmp.eq.s32.totalorder %s22, 1
      %p139 = por %p137, %p138
      %p141 = scmp.ne.s32.totalorder %s126, %s140
      %p142 = scmp.eq.s32.totalorder %s22, 0
      %p143 = por %p141, %p142
      %s144 = ssub.s32 %s16, %s23
      %p145 = scmp.eq.s32.totalorder %s144, 0
      %s147 = sadd.s32 %s146, 1
      %s148 = scalar_select %p145, %s146, %s147
      %p151 = pneg %p145
      %p152 = scmp.eq.s32.totalorder %s16, 1
      %p153 = por %p151, %p152
      %p154 = scmp.ne.s32.totalorder %s146, %s149
      %p155 = scmp.eq.s32.totalorder %s16, 0
      %p156 = por %p154, %p155
      %p157 = scmp.ne.s32.totalorder %s146, %s149
      %p158 = scmp.eq.s32.totalorder %s21, 1
      %p159 = por %p157, %p158
      %p160 = scmp.ne.s32.totalorder %s149, %s150
      %p161 = scmp.eq.s32.totalorder %s21, 0
      %p162 = por %p160, %p161
      %p163 = scmp.ne.s32.totalorder %s149, %s150
      %p164 = scmp.eq.s32.totalorder %s22, 1
      %p165 = por %p163, %p164
      %p167 = scmp.ne.s32.totalorder %s150, %s166
      %p168 = scmp.eq.s32.totalorder %s22, 0
      %p169 = por %p167, %p168
      %p170 = scmp.le.s32.totalorder 1, %s16
      %p171 = scmp.lt.s32.totalorder %s16, 3
      %p172 = pnand %p170, %p171
      %p173 = pneg %p172
      // Predicated region
      $region9: #{tpu_custom_call.1} parent=5 // pred_check
        _
      $region10: #{tpu_custom_call.1} parent=5 // pred_check_branch
        %175 = sbr.rel (%p172) target = $region12
      $region11: #{tpu_custom_call.1} parent=5 // pred_region
        %s176 = ssub.s32 %s16, 1
        // Predicated region
        $region13: #{tpu_custom_call.1} parent=11 // pred_check
          %p177 = pneg %p115
        $region14: #{tpu_custom_call.1} parent=11 // pred_check_branch
          %179 = sbr.rel (%p177) target = $region16
        $region15: #{tpu_custom_call.1} parent=11 // pred_region
          %s181 = ssub.s32 8192, 8192
          %182 = vsyncadd [#allocation3], %s181
          %s183 = sshll.u32 [#allocation2], 4
          %s184 = int_to_ptr.vmem [resolvable:$true] %s183
          %189 = dma.hbm_to_vmem [thread:$0]  %s3, 8192, %s184, [#allocation3], 512, 512, 32
        $region16: #{tpu_custom_call.1} parent=11 // pred_fallthru
          _
        // Predicated region
        $region17: #{tpu_custom_call.1} parent=11 // pred_check
          %p190 = pneg %p136
        $region18: #{tpu_custom_call.1} parent=11 // pred_check_branch
          %192 = sbr.rel (%p190) target = $region20
        $region19: #{tpu_custom_call.1} parent=11 // pred_region
          %s194 = ssub.s32 8192, 8192
          %195 = vsyncadd [#allocation6], %s194
          %s196 = sshll.u32 [#allocation5], 4
          %s197 = int_to_ptr.vmem [resolvable:$true] %s196
          %202 = dma.hbm_to_vmem [thread:$0]  %s4, 8192, %s197, [#allocation6], 512, 512, 32
        $region20: #{tpu_custom_call.1} parent=11 // pred_fallthru
          _
      $region12: #{tpu_custom_call.1} parent=5 // pred_fallthru
        _
      %p203 = scmp.lt.s32.totalorder %s16, 2
      // Predicated region
      $region21: #{tpu_custom_call.1} parent=5 // pred_check
        %p204 = pneg %p203
      $region22: #{tpu_custom_call.1} parent=5 // pred_check_branch
        %206 = sbr.rel (%p204) target = $region24
      $region23: #{tpu_custom_call.1} parent=5 // pred_region
        // Predicated region
        $region25: #{tpu_custom_call.1} parent=23 // pred_check
          %p207 = pneg %p36
        $region26: #{tpu_custom_call.1} parent=23 // pred_check_branch
          %209 = sbr.rel (%p207) target = $region28
        $region27: #{tpu_custom_call.1} parent=23 // pred_region
          %p210 = scmp.lt.s32.totalorder %s16, 1
          %s211 = scalar_select %p210, %s16, 1
          %s212 = smul.addr %s211, 2
          %s213 = smul.addr %s212, 8
          %s214 = scalar_lea.vmem %s0, %s213
        $region28: #{tpu_custom_call.1} parent=23 // pred_fallthru
          _
        // Predicated region
        $region29: #{tpu_custom_call.1} parent=23 // pred_check
          %p215 = pneg %p62
        $region30: #{tpu_custom_call.1} parent=23 // pred_check_branch
          %217 = sbr.rel (%p215) target = $region32
        $region31: #{tpu_custom_call.1} parent=23 // pred_region
          %p218 = scmp.lt.s32.totalorder %s16, 1
          %s219 = scalar_select %p218, %s16, 1
          %s220 = smul.addr %s219, 2
          %s221 = smul.addr %s220, 8
          %s222 = scalar_lea.vmem %s1, %s221
        $region32: #{tpu_custom_call.1} parent=23 // pred_fallthru
          _
        // Predicated region
        $region33: #{tpu_custom_call.1} parent=23 // pred_check
          %p223 = pneg %p88
        $region34: #{tpu_custom_call.1} parent=23 // pred_check_branch
          %225 = sbr.rel (%p223) target = $region36
        $region35: #{tpu_custom_call.1} parent=23 // pred_region
          %p226 = scmp.lt.s32.totalorder %s16, 1
          %s227 = scalar_select %p226, %s16, 1
          %s228 = scalar_lea.vmem %s2, %s227
        $region36: #{tpu_custom_call.1} parent=23 // pred_fallthru
          _
      $region24: #{tpu_custom_call.1} parent=5 // pred_fallthru
        _
      %p229 = scmp.le.s32.totalorder 1, %s16
      %p230 = scmp.lt.s32.totalorder %s16, 3
      %p231 = pnand %p229, %p230
      %p232 = pneg %p231
      // Predicated region
      $region37: #{tpu_custom_call.1} parent=5 // pred_check
        _
      $region38: #{tpu_custom_call.1} parent=5 // pred_check_branch
        %234 = sbr.rel (%p231) target = $region40
      $region39: #{tpu_custom_call.1} parent=5 // pred_region
        %s235 = ssub.s32 %s16, 1
        // Predicated region
        $region41: #{tpu_custom_call.1} parent=39 // pred_check
          %p236 = pneg %p115
        $region42: #{tpu_custom_call.1} parent=39 // pred_check_branch
          %238 = sbr.rel (%p236) target = $region44
        $region43: #{tpu_custom_call.1} parent=39 // pred_region
          %239 = dma.done [#allocation3], 8192
        $region44: #{tpu_custom_call.1} parent=39 // pred_fallthru
          _
        // Predicated region
        $region45: #{tpu_custom_call.1} parent=39 // pred_check
          %p240 = pneg %p136
        $region46: #{tpu_custom_call.1} parent=39 // pred_check_branch
          %242 = sbr.rel (%p240) target = $region48
        $region47: #{tpu_custom_call.1} parent=39 // pred_region
          %243 = dma.done [#allocation6], 8192
        $region48: #{tpu_custom_call.1} parent=39 // pred_fallthru
          _
        %p244 = scmp.lt.s32.totalorder %s21, 1
        %s245 = scalar_select %p244, %s21, 1
        %s246 = smul.addr %s245, 2
        %s247 = smul.addr %s246, 8
        %s248 = scalar_lea.vmem %s0, %s247
        %p249 = pneg %p42
        %p250 = pneg %p39
        %p251 = scmp.lt.s32.totalorder %s21, 1
        %s252 = scalar_select %p251, %s21, 1
        %s253 = smul.addr %s252, 2
        %s254 = smul.addr %s253, 8
        %s255 = scalar_lea.vmem %s1, %s254
        %p256 = pneg %p68
        %p257 = pneg %p65
        %p258 = scmp.lt.s32.totalorder %s21, 1
        %s259 = scalar_select %p258, %s21, 1
        %s260 = scalar_lea.vmem %s2, %s259
        %p261 = pneg %p94
        %p262 = pneg %p91
        %p263 = pneg %p115
        %p264 = pneg %p112
        %p265 = pneg %p136
        %p266 = pneg %p133
        %p267 = pneg %p162
        %p268 = pneg %p159
        %s269 = sand.u32 %s149, 1
        %s270 = scalar_lea.sflag [#allocation4], %s269
        %s271 = sand.u32 %s149, 1
        %s272 = smul.addr %s271, 16
        %s273 = scalar_lea.vmem [#allocation7], %s272
        %p274 = scmp.lt.s32.totalorder %s21, 1
        %s275 = scalar_select %p274, %s21, 1
        %s276 = smul.addr %s275, 2
        %s277 = smul.addr %s276, 8
        %s278 = scalar_lea.vmem %s0, %s277
        %p279 = scmp.lt.s32.totalorder %s21, 1
        %s280 = scalar_select %p279, %s21, 1
        %s281 = smul.addr %s280, 2
        %s282 = smul.addr %s281, 8
        %s283 = scalar_lea.vmem %s1, %s282
        %p284 = scmp.lt.s32.totalorder %s21, 1
        %s285 = scalar_select %p284, %s21, 1
        %s286 = scalar_lea.vmem %s2, %s285
        %v287 = vld [vmem:[%s278] sm:$0xff]
        %v288 = vld [vmem:[%s278 + $0x8] sm:$0xff]
        %v289 = vld [vmem:[%s283] sm:$0xff]
        %v290 = vld [vmem:[%s283 + $0x8] sm:$0xff]
        %v291 = vld [vmem:[%s286] sm:$0x1]
        %v292 = vlaneseq
        %v293 = vand.u32 %v292, 127
        %v294 = vlaneseq
        %v295 = vshrl.u32 %v294, 7
        %v296 = vadd.s32 %v295, 8
        %297 = vset.pattern.permute.xlu0 0
        %298 = vperm.xlu0 %297, %v289
        %v299 = vpop.permute.xlu0 %298
        %300 = vset.pattern.permute.xlu0 0
        %301 = vperm.xlu0 %300, %v290
        %v302 = vpop.permute.xlu0 %301
        %vm303 = vcmp.eq.s32.totalorder %v299, %v293
        %vm304 = vcmp.eq.s32.totalorder %v302, %v293
        %v305 = vsel %vm303, 1, 0
        %v306 = vsel %vm304, 1, 0
        %v307 = vcvt.s32.f32 %v305
        %v308 = vcvt.s32.f32 %v306
        %v309 = vlaneseq
        %v310 = vshrl.u32 %v309, 7
        %v311 = vsub.s32 0, %v310
        %v312 = vrot.slane %v291, %v311
        %vm313 = vcmp.eq.s32.totalorder %v295, %v312
        %vm314 = vcmp.eq.s32.totalorder %v296, %v312
        %v315 = vsel %vm313, 1, 0
        %v316 = vsel %vm314, 1, 0
        %v317 = vcvt.s32.f32 %v315
        %v318 = vcvt.s32.f32 %v316
        %319 = vset.pattern.permute.xlu0 1
        %320 = vperm.xlu0 %319, %v289
        %v321 = vpop.permute.xlu0 %320
        %322 = vset.pattern.permute.xlu0 1
        %323 = vperm.xlu0 %322, %v290
        %v324 = vpop.permute.xlu0 %323
        %vm325 = vcmp.eq.s32.totalorder %v321, %v293
        %vm326 = vcmp.eq.s32.totalorder %v324, %v293
        %v327 = vsel %vm325, 1, 0
        %v328 = vsel %vm326, 1, 0
        %v329 = vcvt.s32.f32 %v327
        %v330 = vcvt.s32.f32 %v328
        %v331 = vld [vmem:[#allocation5] sm:$0xff]
        %v332 = vld [vmem:[#allocation5 + $0x8] sm:$0xff]
        %v333 = vld [vmem:[#allocation5 + $0x10] sm:$0xff]
        %v334 = vld [vmem:[#allocation5 + $0x18] sm:$0xff]
        %v335 = vld [vmem:[#allocation5 + $0x20] sm:$0xff]
        %v336 = vld [vmem:[#allocation5 + $0x28] sm:$0xff]
        %v337 = vld [vmem:[#allocation5 + $0x30] sm:$0xff]
        %v338 = vld [vmem:[#allocation5 + $0x38] sm:$0xff]
        %v339 = vld [vmem:[#allocation5 + $0x40] sm:$0xff]
        %v340 = vld [vmem:[#allocation5 + $0x48] sm:$0xff]
        %v341 = vld [vmem:[#allocation5 + $0x50] sm:$0xff]
        %v342 = vld [vmem:[#allocation5 + $0x58] sm:$0xff]
        %v343 = vld [vmem:[#allocation5 + $0x60] sm:$0xff]
        %v344 = vld [vmem:[#allocation5 + $0x68] sm:$0xff]
        %v345 = vld [vmem:[#allocation5 + $0x70] sm:$0xff]
        %v346 = vld [vmem:[#allocation5 + $0x78] sm:$0xff]
        %v347 = vld [vmem:[#allocation5 + $0x80] sm:$0xff]
        %v348 = vld [vmem:[#allocation5 + $0x88] sm:$0xff]
        %v349 = vld [vmem:[#allocation5 + $0x90] sm:$0xff]
        %v350 = vld [vmem:[#allocation5 + $0x98] sm:$0xff]
        %v351 = vld [vmem:[#allocation5 + $0xa0] sm:$0xff]
        %v352 = vld [vmem:[#allocation5 + $0xa8] sm:$0xff]
        %v353 = vld [vmem:[#allocation5 + $0xb0] sm:$0xff]
        %v354 = vld [vmem:[#allocation5 + $0xb8] sm:$0xff]
        %v355 = vld [vmem:[#allocation5 + $0xc0] sm:$0xff]
        %v356 = vld [vmem:[#allocation5 + $0xc8] sm:$0xff]
        %v357 = vld [vmem:[#allocation5 + $0xd0] sm:$0xff]
        %v358 = vld [vmem:[#allocation5 + $0xd8] sm:$0xff]
        %v359 = vld [vmem:[#allocation5 + $0xe0] sm:$0xff]
        %v360 = vld [vmem:[#allocation5 + $0xe8] sm:$0xff]
        %v361 = vld [vmem:[#allocation5 + $0xf0] sm:$0xff]
        %v362 = vld [vmem:[#allocation5 + $0xf8] sm:$0xff]
        %v363 = vld [vmem:[#allocation5 + $0x100] sm:$0xff]
        %v364 = vld [vmem:[#allocation5 + $0x108] sm:$0xff]
        %v365 = vld [vmem:[#allocation5 + $0x110] sm:$0xff]
        %v366 = vld [vmem:[#allocation5 + $0x118] sm:$0xff]
        %v367 = vld [vmem:[#allocation5 + $0x120] sm:$0xff]
        %v368 = vld [vmem:[#allocation5 + $0x128] sm:$0xff]
        %v369 = vld [vmem:[#allocation5 + $0x130] sm:$0xff]
        %v370 = vld [vmem:[#allocation5 + $0x138] sm:$0xff]
        %v371 = vld [vmem:[#allocation5 + $0x140] sm:$0xff]
        %v372 = vld [vmem:[#allocation5 + $0x148] sm:$0xff]
        %v373 = vld [vmem:[#allocation5 + $0x150] sm:$0xff]
        %v374 = vld [vmem:[#allocation5 + $0x158] sm:$0xff]
        %v375 = vld [vmem:[#allocation5 + $0x160] sm:$0xff]
        %v376 = vld [vmem:[#allocation5 + $0x168] sm:$0xff]
        %v377 = vld [vmem:[#allocation5 + $0x170] sm:$0xff]
        %v378 = vld [vmem:[#allocation5 + $0x178] sm:$0xff]
        %v379 = vld [vmem:[#allocation5 + $0x180] sm:$0xff]
        %v380 = vld [vmem:[#allocation5 + $0x188] sm:$0xff]
        %v381 = vld [vmem:[#allocation5 + $0x190] sm:$0xff]
        %v382 = vld [vmem:[#allocation5 + $0x198] sm:$0xff]
        %v383 = vld [vmem:[#allocation5 + $0x1a0] sm:$0xff]
        %v384 = vld [vmem:[#allocation5 + $0x1a8] sm:$0xff]
        %v385 = vld [vmem:[#allocation5 + $0x1b0] sm:$0xff]
        %v386 = vld [vmem:[#allocation5 + $0x1b8] sm:$0xff]
        %v387 = vld [vmem:[#allocation5 + $0x1c0] sm:$0xff]
        %v388 = vld [vmem:[#allocation5 + $0x1c8] sm:$0xff]
        %v389 = vld [vmem:[#allocation5 + $0x1d0] sm:$0xff]
        %v390 = vld [vmem:[#allocation5 + $0x1d8] sm:$0xff]
        %v391 = vld [vmem:[#allocation5 + $0x1e0] sm:$0xff]
        %v392 = vld [vmem:[#allocation5 + $0x1e8] sm:$0xff]
        %v393 = vld [vmem:[#allocation5 + $0x1f0] sm:$0xff]
        %v394 = vld [vmem:[#allocation5 + $0x1f8] sm:$0xff]
        %395 = vmatprep.subr.mxu0 %v332
        %396 = vmatpush1.msra.mxu0 %v331
        %397 = vmatprep.subr.mxu0 %v336
        %398 = vmatpush1.msra.mxu0 %v335
        %399 = vmatprep.subr.mxu0 %v340
        %400 = vmatpush1.msra.mxu0 %v339
        %401 = vmatprep.subr.mxu0 %v344
        %402 = vmatpush1.msra.mxu0 %v343
        %403 = vmatprep.subr.mxu0 %v348
        %404 = vmatpush1.msra.mxu0 %v347
        %405 = vmatprep.subr.mxu0 %v352
        %406 = vmatpush1.msra.mxu0 %v351
        %407 = vmatprep.subr.mxu0 %v356
        %408 = vmatpush1.msra.mxu0 %v355
        %409 = vmatprep.subr.mxu0 %v360
        %410 = vmatpush1.msra.mxu0 %v359
        %411 = vmatprep.subr.mxu0 %v364
        %412 = vmatpush1.msra.mxu0 %v363
        %413 = vmatprep.subr.mxu0 %v368
        %414 = vmatpush1.msra.mxu0 %v367
        %415 = vmatprep.subr.mxu0 %v372
        %416 = vmatpush1.msra.mxu0 %v371
        %417 = vmatprep.subr.mxu0 %v376
        %418 = vmatpush1.msra.mxu0 %v375
        %419 = vmatprep.subr.mxu0 %v380
        %420 = vmatpush1.msra.mxu0 %v379
        %421 = vmatprep.subr.mxu0 %v384
        %422 = vmatpush1.msra.mxu0 %v383
        %423 = vmatprep.subr.mxu0 %v388
        %424 = vmatpush1.msra.mxu0 %v387
        %425 = vmatprep.subr.mxu0 %v392
        %426 = vmatpush1.msra.mxu0 %v391
        %427 = vmatprep.subr.mxu0 0.0
        %428 = vmatpush1.msra.mxu0 0.0
        %429 = vmatprep.subr.mxu0 0.0
        %430 = vmatpush1.msra.mxu0 0.0
        %431 = vmatprep.subr.mxu0 0.0
        %432 = vmatpush1.msra.mxu0 0.0
        %433 = vmatprep.subr.mxu0 0.0
        %434 = vmatpush1.msra.mxu0 0.0
        %435 = vmatprep.subr.mxu0 0.0
        %436 = vmatpush1.msra.mxu0 0.0
        %437 = vmatprep.subr.mxu0 0.0
        %438 = vmatpush1.msra.mxu0 0.0
        %439 = vmatprep.subr.mxu0 0.0
        %440 = vmatpush1.msra.mxu0 0.0
        %441 = vmatprep.subr.mxu0 0.0
        %442 = vmatpush1.msra.mxu0 0.0
        %443 = vmatprep.subr.mxu0 0.0
        %444 = vmatpush1.msra.mxu0 0.0
        %445 = vmatprep.subr.mxu0 0.0
        %446 = vmatpush1.msra.mxu0 0.0
        %447 = vmatprep.subr.mxu0 0.0
        %448 = vmatpush1.msra.mxu0 0.0
        %449 = vmatprep.subr.mxu0 0.0
        %450 = vmatpush1.msra.mxu0 0.0
        %451 = vmatprep.subr.mxu0 0.0
        %452 = vmatpush1.msra.mxu0 0.0
        %453 = vmatprep.subr.mxu0 0.0
        %454 = vmatpush1.msra.mxu0 0.0
        %455 = vmatprep.subr.mxu0 0.0
        %456 = vmatpush1.msra.mxu0 0.0
        %457 = vmatprep.subr.mxu0 0.0
        %458 = vmatpush1.msra.mxu0 0.0
        %459 = vmatprep.mubr.f32.mxu0 0.0
        %460 = vmatmul.mubr.f32.gmra.mrb[0].mxu0 %v329
        %v461 = vpop.f32.mrb[0].mxu0
        %v462 = vadd.f32 0.0, %v461
        %v463 = vpop.f32.mrb[0].mxu0
        %v464 = vadd.f32 0.0, %v463
        %465 = vmatprep.mubr.f32.mxu0 0.0
        %466 = vmatmul.mubr.f32.gmra.mrb[0].mxu0 %v330
        %v467 = vpop.f32.mrb[0].mxu0
        %v468 = vadd.f32 0.0, %v467
        %v469 = vpop.f32.mrb[0].mxu0
        %v470 = vadd.f32 0.0, %v469
        %471 = vdwg.mxu0
        %472 = vmatprep.subr.mxu0 %v334
        %473 = vmatpush1.msra.mxu0 %v333
        %474 = vmatprep.subr.mxu0 %v338
        %475 = vmatpush1.msra.mxu0 %v337
        %476 = vmatprep.subr.mxu0 %v342
        %477 = vmatpush1.msra.mxu0 %v341
        %478 = vmatprep.subr.mxu0 %v346
        %479 = vmatpush1.msra.mxu0 %v345
        %480 = vmatprep.subr.mxu0 %v350
        %481 = vmatpush1.msra.mxu0 %v349
        %482 = vmatprep.subr.mxu0 %v354
        %483 = vmatpush1.msra.mxu0 %v353
        %484 = vmatprep.subr.mxu0 %v358
        %485 = vmatpush1.msra.mxu0 %v357
        %486 = vmatprep.subr.mxu0 %v362
        %487 = vmatpush1.msra.mxu0 %v361
        %488 = vmatprep.subr.mxu0 %v366
        %489 = vmatpush1.msra.mxu0 %v365
        %490 = vmatprep.subr.mxu0 %v370
        %491 = vmatpush1.msra.mxu0 %v369
        %492 = vmatprep.subr.mxu0 %v374
        %493 = vmatpush1.msra.mxu0 %v373
        %494 = vmatprep.subr.mxu0 %v378
        %495 = vmatpush1.msra.mxu0 %v377
        %496 = vmatprep.subr.mxu0 %v382
        %497 = vmatpush1.msra.mxu0 %v381
        %498 = vmatprep.subr.mxu0 %v386
        %499 = vmatpush1.msra.mxu0 %v385
        %500 = vmatprep.subr.mxu0 %v390
        %501 = vmatpush1.msra.mxu0 %v389
        %502 = vmatprep.subr.mxu0 %v394
        %503 = vmatpush1.msra.mxu0 %v393
        %504 = vmatprep.subr.mxu0 0.0
        %505 = vmatpush1.msra.mxu0 0.0
        %506 = vmatprep.subr.mxu0 0.0
        %507 = vmatpush1.msra.mxu0 0.0
        %508 = vmatprep.subr.mxu0 0.0
        %509 = vmatpush1.msra.mxu0 0.0
        %510 = vmatprep.subr.mxu0 0.0
        %511 = vmatpush1.msra.mxu0 0.0
        %512 = vmatprep.subr.mxu0 0.0
        %513 = vmatpush1.msra.mxu0 0.0
        %514 = vmatprep.subr.mxu0 0.0
        %515 = vmatpush1.msra.mxu0 0.0
        %516 = vmatprep.subr.mxu0 0.0
        %517 = vmatpush1.msra.mxu0 0.0
        %518 = vmatprep.subr.mxu0 0.0
        %519 = vmatpush1.msra.mxu0 0.0
        %520 = vmatprep.subr.mxu0 0.0
        %521 = vmatpush1.msra.mxu0 0.0
        %522 = vmatprep.subr.mxu0 0.0
        %523 = vmatpush1.msra.mxu0 0.0
        %524 = vmatprep.subr.mxu0 0.0
        %525 = vmatpush1.msra.mxu0 0.0
        %526 = vmatprep.subr.mxu0 0.0
        %527 = vmatpush1.msra.mxu0 0.0
        %528 = vmatprep.subr.mxu0 0.0
        %529 = vmatpush1.msra.mxu0 0.0
        %530 = vmatprep.subr.mxu0 0.0
        %531 = vmatpush1.msra.mxu0 0.0
        %532 = vmatprep.subr.mxu0 0.0
        %533 = vmatpush1.msra.mxu0 0.0
        %534 = vmatprep.subr.mxu0 0.0
        %535 = vmatpush1.msra.mxu0 0.0
        %536 = vmatprep.mubr.f32.mxu0 0.0
        %537 = vmatmul.mubr.f32.gmra.mrb[0].mxu0 %v329
        %v538 = vpop.f32.mrb[0].mxu0
        %v539 = vadd.f32 0.0, %v538
        %v540 = vpop.f32.mrb[0].mxu0
        %v541 = vadd.f32 0.0, %v540
        %542 = vmatprep.mubr.f32.mxu0 0.0
        %543 = vmatmul.mubr.f32.gmra.mrb[0].mxu0 %v330
        %v544 = vpop.f32.mrb[0].mxu0
        %v545 = vadd.f32 0.0, %v544
        %v546 = vpop.f32.mrb[0].mxu0
        %v547 = vadd.f32 0.0, %v546
        %548 = vdwg.mxu0
        %v549 = vld [vmem:[#allocation2] sm:$0xff]
        %v550 = vld [vmem:[#allocation2 + $0x8] sm:$0xff]
        %v551 = vld [vmem:[#allocation2 + $0x10] sm:$0xff]
        %v552 = vld [vmem:[#allocation2 + $0x18] sm:$0xff]
        %v553 = vld [vmem:[#allocation2 + $0x20] sm:$0xff]
        %v554 = vld [vmem:[#allocation2 + $0x28] sm:$0xff]
        %v555 = vld [vmem:[#allocation2 + $0x30] sm:$0xff]
        %v556 = vld [vmem:[#allocation2 + $0x38] sm:$0xff]
        %v557 = vld [vmem:[#allocation2 + $0x40] sm:$0xff]
        %v558 = vld [vmem:[#allocation2 + $0x48] sm:$0xff]
        %v559 = vld [vmem:[#allocation2 + $0x50] sm:$0xff]
        %v560 = vld [vmem:[#allocation2 + $0x58] sm:$0xff]
        %v561 = vld [vmem:[#allocation2 + $0x60] sm:$0xff]
        %v562 = vld [vmem:[#allocation2 + $0x68] sm:$0xff]
        %v563 = vld [vmem:[#allocation2 + $0x70] sm:$0xff]
        %v564 = vld [vmem:[#allocation2 + $0x78] sm:$0xff]
        %v565 = vld [vmem:[#allocation2 + $0x80] sm:$0xff]
        %v566 = vld [vmem:[#allocation2 + $0x88] sm:$0xff]
        %v567 = vld [vmem:[#allocation2 + $0x90] sm:$0xff]
        %v568 = vld [vmem:[#allocation2 + $0x98] sm:$0xff]
        %v569 = vld [vmem:[#allocation2 + $0xa0] sm:$0xff]
        %v570 = vld [vmem:[#allocation2 + $0xa8] sm:$0xff]
        %v571 = vld [vmem:[#allocation2 + $0xb0] sm:$0xff]
        %v572 = vld [vmem:[#allocation2 + $0xb8] sm:$0xff]
        %v573 = vld [vmem:[#allocation2 + $0xc0] sm:$0xff]
        %v574 = vld [vmem:[#allocation2 + $0xc8] sm:$0xff]
        %v575 = vld [vmem:[#allocation2 + $0xd0] sm:$0xff]
        %v576 = vld [vmem:[#allocation2 + $0xd8] sm:$0xff]
        %v577 = vld [vmem:[#allocation2 + $0xe0] sm:$0xff]
        %v578 = vld [vmem:[#allocation2 + $0xe8] sm:$0xff]
        %v579 = vld [vmem:[#allocation2 + $0xf0] sm:$0xff]
        %v580 = vld [vmem:[#allocation2 + $0xf8] sm:$0xff]
        %v581 = vld [vmem:[#allocation2 + $0x100] sm:$0xff]
        %v582 = vld [vmem:[#allocation2 + $0x108] sm:$0xff]
        %v583 = vld [vmem:[#allocation2 + $0x110] sm:$0xff]
        %v584 = vld [vmem:[#allocation2 + $0x118] sm:$0xff]
        %v585 = vld [vmem:[#allocation2 + $0x120] sm:$0xff]
        %v586 = vld [vmem:[#allocation2 + $0x128] sm:$0xff]
        %v587 = vld [vmem:[#allocation2 + $0x130] sm:$0xff]
        %v588 = vld [vmem:[#allocation2 + $0x138] sm:$0xff]
        %v589 = vld [vmem:[#allocation2 + $0x140] sm:$0xff]
        %v590 = vld [vmem:[#allocation2 + $0x148] sm:$0xff]
        %v591 = vld [vmem:[#allocation2 + $0x150] sm:$0xff]
        %v592 = vld [vmem:[#allocation2 + $0x158] sm:$0xff]
        %v593 = vld [vmem:[#allocation2 + $0x160] sm:$0xff]
        %v594 = vld [vmem:[#allocation2 + $0x168] sm:$0xff]
        %v595 = vld [vmem:[#allocation2 + $0x170] sm:$0xff]
        %v596 = vld [vmem:[#allocation2 + $0x178] sm:$0xff]
        %v597 = vld [vmem:[#allocation2 + $0x180] sm:$0xff]
        %v598 = vld [vmem:[#allocation2 + $0x188] sm:$0xff]
        %v599 = vld [vmem:[#allocation2 + $0x190] sm:$0xff]
        %v600 = vld [vmem:[#allocation2 + $0x198] sm:$0xff]
        %v601 = vld [vmem:[#allocation2 + $0x1a0] sm:$0xff]
        %v602 = vld [vmem:[#allocation2 + $0x1a8] sm:$0xff]
        %v603 = vld [vmem:[#allocation2 + $0x1b0] sm:$0xff]
        %v604 = vld [vmem:[#allocation2 + $0x1b8] sm:$0xff]
        %v605 = vld [vmem:[#allocation2 + $0x1c0] sm:$0xff]
        %v606 = vld [vmem:[#allocation2 + $0x1c8] sm:$0xff]
        %v607 = vld [vmem:[#allocation2 + $0x1d0] sm:$0xff]
        %v608 = vld [vmem:[#allocation2 + $0x1d8] sm:$0xff]
        %v609 = vld [vmem:[#allocation2 + $0x1e0] sm:$0xff]
        %v610 = vld [vmem:[#allocation2 + $0x1e8] sm:$0xff]
        %v611 = vld [vmem:[#allocation2 + $0x1f0] sm:$0xff]
        %v612 = vld [vmem:[#allocation2 + $0x1f8] sm:$0xff]
        %613 = vmatprep.subr.mxu0 %v550
        %614 = vmatpush1.msra.mxu0 %v549
        %615 = vmatprep.subr.mxu0 %v554
        %616 = vmatpush1.msra.mxu0 %v553
        %617 = vmatprep.subr.mxu0 %v558
        %618 = vmatpush1.msra.mxu0 %v557
        %619 = vmatprep.subr.mxu0 %v562
        %620 = vmatpush1.msra.mxu0 %v561
        %621 = vmatprep.subr.mxu0 %v566
        %622 = vmatpush1.msra.mxu0 %v565
        %623 = vmatprep.subr.mxu0 %v570
        %624 = vmatpush1.msra.mxu0 %v569
        %625 = vmatprep.subr.mxu0 %v574
        %626 = vmatpush1.msra.mxu0 %v573
        %627 = vmatprep.subr.mxu0 %v578
        %628 = vmatpush1.msra.mxu0 %v577
        %629 = vmatprep.subr.mxu0 %v582
        %630 = vmatpush1.msra.mxu0 %v581
        %631 = vmatprep.subr.mxu0 %v586
        %632 = vmatpush1.msra.mxu0 %v585
        %633 = vmatprep.subr.mxu0 %v590
        %634 = vmatpush1.msra.mxu0 %v589
        %635 = vmatprep.subr.mxu0 %v594
        %636 = vmatpush1.msra.mxu0 %v593
        %637 = vmatprep.subr.mxu0 %v598
        %638 = vmatpush1.msra.mxu0 %v597
        %639 = vmatprep.subr.mxu0 %v602
        %640 = vmatpush1.msra.mxu0 %v601
        %641 = vmatprep.subr.mxu0 %v606
        %642 = vmatpush1.msra.mxu0 %v605
        %643 = vmatprep.subr.mxu0 %v610
        %644 = vmatpush1.msra.mxu0 %v609
        %645 = vmatprep.subr.mxu0 0.0
        %646 = vmatpush1.msra.mxu0 0.0
        %647 = vmatprep.subr.mxu0 0.0
        %648 = vmatpush1.msra.mxu0 0.0
        %649 = vmatprep.subr.mxu0 0.0
        %650 = vmatpush1.msra.mxu0 0.0
        %651 = vmatprep.subr.mxu0 0.0
        %652 = vmatpush1.msra.mxu0 0.0
        %653 = vmatprep.subr.mxu0 0.0
        %654 = vmatpush1.msra.mxu0 0.0
        %655 = vmatprep.subr.mxu0 0.0
        %656 = vmatpush1.msra.mxu0 0.0
        %657 = vmatprep.subr.mxu0 0.0
        %658 = vmatpush1.msra.mxu0 0.0
        %659 = vmatprep.subr.mxu0 0.0
        %660 = vmatpush1.msra.mxu0 0.0
        %661 = vmatprep.subr.mxu0 0.0
        %662 = vmatpush1.msra.mxu0 0.0
        %663 = vmatprep.subr.mxu0 0.0
        %664 = vmatpush1.msra.mxu0 0.0
        %665 = vmatprep.subr.mxu0 0.0
        %666 = vmatpush1.msra.mxu0 0.0
        %667 = vmatprep.subr.mxu0 0.0
        %668 = vmatpush1.msra.mxu0 0.0
        %669 = vmatprep.subr.mxu0 0.0
        %670 = vmatpush1.msra.mxu0 0.0
        %671 = vmatprep.subr.mxu0 0.0
        %672 = vmatpush1.msra.mxu0 0.0
        %673 = vmatprep.subr.mxu0 0.0
        %674 = vmatpush1.msra.mxu0 0.0
        %675 = vmatprep.subr.mxu0 0.0
        %676 = vmatpush1.msra.mxu0 0.0
        %677 = vmatprep.mubr.f32.mxu0 0.0
        %678 = vmatmul.mubr.f32.gmra.mrb[0].mxu0 %v287
        %v679 = vpop.f32.mrb[0].mxu0
        %v680 = vadd.f32 0.0, %v679
        %v681 = vpop.f32.mrb[0].mxu0
        %v682 = vadd.f32 0.0, %v681
        %683 = vmatprep.mubr.f32.mxu0 0.0
        %684 = vmatmul.mubr.f32.gmra.mrb[0].mxu0 %v288
        %v685 = vpop.f32.mrb[0].mxu0
        %v686 = vadd.f32 0.0, %v685
        %v687 = vpop.f32.mrb[0].mxu0
        %v688 = vadd.f32 0.0, %v687
        %689 = vdwg.mxu0
        %690 = vmatprep.subr.mxu0 %v552
        %691 = vmatpush1.msra.mxu0 %v551
        %692 = vmatprep.subr.mxu0 %v556
        %693 = vmatpush1.msra.mxu0 %v555
        %694 = vmatprep.subr.mxu0 %v560
        %695 = vmatpush1.msra.mxu0 %v559
        %696 = vmatprep.subr.mxu0 %v564
        %697 = vmatpush1.msra.mxu0 %v563
        %698 = vmatprep.subr.mxu0 %v568
        %699 = vmatpush1.msra.mxu0 %v567
        %700 = vmatprep.subr.mxu0 %v572
        %701 = vmatpush1.msra.mxu0 %v571
        %702 = vmatprep.subr.mxu0 %v576
        %703 = vmatpush1.msra.mxu0 %v575
        %704 = vmatprep.subr.mxu0 %v580
        %705 = vmatpush1.msra.mxu0 %v579
        %706 = vmatprep.subr.mxu0 %v584
        %707 = vmatpush1.msra.mxu0 %v583
        %708 = vmatprep.subr.mxu0 %v588
        %709 = vmatpush1.msra.mxu0 %v587
        %710 = vmatprep.subr.mxu0 %v592
        %711 = vmatpush1.msra.mxu0 %v591
        %712 = vmatprep.subr.mxu0 %v596
        %713 = vmatpush1.msra.mxu0 %v595
        %714 = vmatprep.subr.mxu0 %v600
        %715 = vmatpush1.msra.mxu0 %v599
        %716 = vmatprep.subr.mxu0 %v604
        %717 = vmatpush1.msra.mxu0 %v603
        %718 = vmatprep.subr.mxu0 %v608
        %719 = vmatpush1.msra.mxu0 %v607
        %720 = vmatprep.subr.mxu0 %v612
        %721 = vmatpush1.msra.mxu0 %v611
        %722 = vmatprep.subr.mxu0 0.0
        %723 = vmatpush1.msra.mxu0 0.0
        %724 = vmatprep.subr.mxu0 0.0
        %725 = vmatpush1.msra.mxu0 0.0
        %726 = vmatprep.subr.mxu0 0.0
        %727 = vmatpush1.msra.mxu0 0.0
        %728 = vmatprep.subr.mxu0 0.0
        %729 = vmatpush1.msra.mxu0 0.0
        %730 = vmatprep.subr.mxu0 0.0
        %731 = vmatpush1.msra.mxu0 0.0
        %732 = vmatprep.subr.mxu0 0.0
        %733 = vmatpush1.msra.mxu0 0.0
        %734 = vmatprep.subr.mxu0 0.0
        %735 = vmatpush1.msra.mxu0 0.0
        %736 = vmatprep.subr.mxu0 0.0
        %737 = vmatpush1.msra.mxu0 0.0
        %738 = vmatprep.subr.mxu0 0.0
        %739 = vmatpush1.msra.mxu0 0.0
        %740 = vmatprep.subr.mxu0 0.0
        %741 = vmatpush1.msra.mxu0 0.0
        %742 = vmatprep.subr.mxu0 0.0
        %743 = vmatpush1.msra.mxu0 0.0
        %744 = vmatprep.subr.mxu0 0.0
        %745 = vmatpush1.msra.mxu0 0.0
        %746 = vmatprep.subr.mxu0 0.0
        %747 = vmatpush1.msra.mxu0 0.0
        %748 = vmatprep.subr.mxu0 0.0
        %749 = vmatpush1.msra.mxu0 0.0
        %750 = vmatprep.subr.mxu0 0.0
        %751 = vmatpush1.msra.mxu0 0.0
        %752 = vmatprep.subr.mxu0 0.0
        %753 = vmatpush1.msra.mxu0 0.0
        %754 = vmatprep.mubr.f32.mxu0 0.0
        %755 = vmatmul.mubr.f32.gmra.mrb[0].mxu0 %v287
        %v756 = vpop.f32.mrb[0].mxu0
        %v757 = vadd.f32 0.0, %v756
        %v758 = vpop.f32.mrb[0].mxu0
        %v759 = vadd.f32 0.0, %v758
        %760 = vmatprep.mubr.f32.mxu0 0.0
        %761 = vmatmul.mubr.f32.gmra.mrb[0].mxu0 %v288
        %v762 = vpop.f32.mrb[0].mxu0
        %v763 = vadd.f32 0.0, %v762
        %v764 = vpop.f32.mrb[0].mxu0
        %v765 = vadd.f32 0.0, %v764
        %766 = vdwg.mxu0
        %v767 = vadd.f32 %v759, %v541
        %v768 = vadd.f32 %v765, %v547
        %v769 = vxor.u32 %v767, 2147483648
        %v770 = vxor.u32 %v768, 2147483648
        %v771 = vmul.f32 %v769, 1.442695
        %v772 = vpow.pop %v771
        %v773 = vmul.f32 %v770, 1.442695
        %v774 = vpow.pop %v773
        %v775 = vadd.f32 %v772, 1.0
        %v776 = vadd.f32 %v774, 1.0
        %v777 = vrcp.pop %v775
        %v778 = vmul.f32 1.0, %v777
        %v779 = vrcp.pop %v776
        %v780 = vmul.f32 1.0, %v779
        %v781 = vadd.f32 %v680, %v462
        %v782 = vadd.f32 %v686, %v468
        %784 = vset.pattern.permute.xlu0 0
        %785 = vperm.xlu0 %784, %v778
        %v786 = vpop.permute.xlu0 %785
        %789 = vset.pattern.permute.xlu0 0
        %790 = vperm.xlu0 %789, %v780
        %v791 = vpop.permute.xlu0 %790
        %v793 = vmul.f32 %v786, %v781
        %v794 = vmul.f32 %v791, %v782
        %v795 = vadd.f32 %v682, %v464
        %v796 = vadd.f32 %v688, %v470
        %797 = vset.pattern.permute.xlu0 2
        %798 = vperm.xlu0 %797, %v778
        %v799 = vpop.permute.xlu0 %798
        %801 = vset.pattern.permute.xlu0 2
        %802 = vperm.xlu0 %801, %v780
        %v803 = vpop.permute.xlu0 %802
        %v805 = vmul.f32 %v799, %v795
        %v806 = vmul.f32 %v803, %v796
        %vm807 = vcmask 130048
        %v809 = vsel %vm807, %v307, 0
        %v812 = vsel %vm807, %v308, 0
        %814 = vmatprep.subr.mxu0 0.0
        %815 = vmatpush1.msra.mxu0 %v757
        %816 = vmatprep.subr.mxu0 0.0
        %817 = vmatpush1.msra.mxu0 %v763
        %818 = vmatprep.subr.mxu0 0.0
        %819 = vmatpush1.msra.mxu0 0.0
        %820 = vmatprep.subr.mxu0 0.0
        %821 = vmatpush1.msra.mxu0 0.0
        %822 = vmatprep.subr.mxu0 0.0
        %823 = vmatpush1.msra.mxu0 0.0
        %824 = vmatprep.subr.mxu0 0.0
        %825 = vmatpush1.msra.mxu0 0.0
        %826 = vmatprep.subr.mxu0 0.0
        %827 = vmatpush1.msra.mxu0 0.0
        %828 = vmatprep.subr.mxu0 0.0
        %829 = vmatpush1.msra.mxu0 0.0
        %830 = vmatprep.subr.mxu0 0.0
        %831 = vmatpush1.msra.mxu0 0.0
        %832 = vmatprep.subr.mxu0 0.0
        %833 = vmatpush1.msra.mxu0 0.0
        %834 = vmatprep.subr.mxu0 0.0
        %835 = vmatpush1.msra.mxu0 0.0
        %836 = vmatprep.subr.mxu0 0.0
        %837 = vmatpush1.msra.mxu0 0.0
        %838 = vmatprep.subr.mxu0 0.0
        %839 = vmatpush1.msra.mxu0 0.0
        %840 = vmatprep.subr.mxu0 0.0
        %841 = vmatpush1.msra.mxu0 0.0
        %842 = vmatprep.subr.mxu0 0.0
        %843 = vmatpush1.msra.mxu0 0.0
        %844 = vmatprep.subr.mxu0 0.0
        %845 = vmatpush1.msra.mxu0 0.0
        %846 = vmatprep.subr.mxu0 0.0
        %847 = vmatpush1.msra.mxu0 0.0
        %848 = vmatprep.subr.mxu0 0.0
        %849 = vmatpush1.msra.mxu0 0.0
        %850 = vmatprep.subr.mxu0 0.0
        %851 = vmatpush1.msra.mxu0 0.0
        %852 = vmatprep.subr.mxu0 0.0
        %853 = vmatpush1.msra.mxu0 0.0
        %854 = vmatprep.subr.mxu0 0.0
        %855 = vmatpush1.msra.mxu0 0.0
        %856 = vmatprep.subr.mxu0 0.0
        %857 = vmatpush1.msra.mxu0 0.0
        %858 = vmatprep.subr.mxu0 0.0
        %859 = vmatpush1.msra.mxu0 0.0
        %860 = vmatprep.subr.mxu0 0.0
        %861 = vmatpush1.msra.mxu0 0.0
        %862 = vmatprep.subr.mxu0 0.0
        %863 = vmatpush1.msra.mxu0 0.0
        %864 = vmatprep.subr.mxu0 0.0
        %865 = vmatpush1.msra.mxu0 0.0
        %866 = vmatprep.subr.mxu0 0.0
        %867 = vmatpush1.msra.mxu0 0.0
        %868 = vmatprep.subr.mxu0 0.0
        %869 = vmatpush1.msra.mxu0 0.0
        %870 = vmatprep.subr.mxu0 0.0
        %871 = vmatpush1.msra.mxu0 0.0
        %872 = vmatprep.subr.mxu0 0.0
        %873 = vmatpush1.msra.mxu0 0.0
        %874 = vmatprep.subr.mxu0 0.0
        %875 = vmatpush1.msra.mxu0 0.0
        %876 = vmatprep.subr.mxu0 0.0
        %877 = vmatpush1.msra.mxu0 0.0
        %878 = vmatprep.mubr.f32.mxu0 0.0
        %879 = vmatmul.mubr.f32.gmra.mrb[0].mxu0 %v809
        %v880 = vpop.f32.mrb[0].mxu0
        %v881 = vadd.f32 %v539, %v880
        %v882 = vpop.f32.mrb[0].mxu0
        %883 = vmatprep.mubr.f32.mxu0 0.0
        %884 = vmatmul.mubr.f32.gmra.mrb[0].mxu0 %v812
        %v885 = vpop.f32.mrb[0].mxu0
        %v886 = vadd.f32 %v545, %v885
        %v887 = vpop.f32.mrb[0].mxu0
        %888 = vdwg.mxu0
        %889 = vset.pattern.permute.xlu0 1
        %890 = vperm.xlu0 %889, %v778
        %v891 = vpop.permute.xlu0 %890
        %893 = vset.pattern.permute.xlu0 1
        %894 = vperm.xlu0 %893, %v780
        %v895 = vpop.permute.xlu0 %894
        %v897 = vmul.f32 %v891, %v881
        %v898 = vmul.f32 %v895, %v886
        %v900 = vsel %vm807, %v317, 0
        %v903 = vsel %vm807, %v318, 0
        %905 = vmatprep.subr.mxu0 0.0
        %906 = vmatpush1.msra.mxu0 %v805
        %907 = vmatprep.subr.mxu0 0.0
        %908 = vmatpush1.msra.mxu0 %v806
        %909 = vmatprep.subr.mxu0 0.0
        %910 = vmatpush1.msra.mxu0 0.0
        %911 = vmatprep.subr.mxu0 0.0
        %912 = vmatpush1.msra.mxu0 0.0
        %913 = vmatprep.subr.mxu0 0.0
        %914 = vmatpush1.msra.mxu0 0.0
        %915 = vmatprep.subr.mxu0 0.0
        %916 = vmatpush1.msra.mxu0 0.0
        %917 = vmatprep.subr.mxu0 0.0
        %918 = vmatpush1.msra.mxu0 0.0
        %919 = vmatprep.subr.mxu0 0.0
        %920 = vmatpush1.msra.mxu0 0.0
        %921 = vmatprep.subr.mxu0 0.0
        %922 = vmatpush1.msra.mxu0 0.0
        %923 = vmatprep.subr.mxu0 0.0
        %924 = vmatpush1.msra.mxu0 0.0
        %925 = vmatprep.subr.mxu0 0.0
        %926 = vmatpush1.msra.mxu0 0.0
        %927 = vmatprep.subr.mxu0 0.0
        %928 = vmatpush1.msra.mxu0 0.0
        %929 = vmatprep.subr.mxu0 0.0
        %930 = vmatpush1.msra.mxu0 0.0
        %931 = vmatprep.subr.mxu0 0.0
        %932 = vmatpush1.msra.mxu0 0.0
        %933 = vmatprep.subr.mxu0 0.0
        %934 = vmatpush1.msra.mxu0 0.0
        %935 = vmatprep.subr.mxu0 0.0
        %936 = vmatpush1.msra.mxu0 0.0
        %937 = vmatprep.subr.mxu0 0.0
        %938 = vmatpush1.msra.mxu0 0.0
        %939 = vmatprep.subr.mxu0 0.0
        %940 = vmatpush1.msra.mxu0 0.0
        %941 = vmatprep.subr.mxu0 0.0
        %942 = vmatpush1.msra.mxu0 0.0
        %943 = vmatprep.subr.mxu0 0.0
        %944 = vmatpush1.msra.mxu0 0.0
        %945 = vmatprep.subr.mxu0 0.0
        %946 = vmatpush1.msra.mxu0 0.0
        %947 = vmatprep.subr.mxu0 0.0
        %948 = vmatpush1.msra.mxu0 0.0
        %949 = vmatprep.subr.mxu0 0.0
        %950 = vmatpush1.msra.mxu0 0.0
        %951 = vmatprep.subr.mxu0 0.0
        %952 = vmatpush1.msra.mxu0 0.0
        %953 = vmatprep.subr.mxu0 0.0
        %954 = vmatpush1.msra.mxu0 0.0
        %955 = vmatprep.subr.mxu0 0.0
        %956 = vmatpush1.msra.mxu0 0.0
        %957 = vmatprep.subr.mxu0 0.0
        %958 = vmatpush1.msra.mxu0 0.0
        %959 = vmatprep.subr.mxu0 0.0
        %960 = vmatpush1.msra.mxu0 0.0
        %961 = vmatprep.subr.mxu0 0.0
        %962 = vmatpush1.msra.mxu0 0.0
        %963 = vmatprep.subr.mxu0 0.0
        %964 = vmatpush1.msra.mxu0 0.0
        %965 = vmatprep.subr.mxu0 0.0
        %966 = vmatpush1.msra.mxu0 0.0
        %967 = vmatprep.subr.mxu0 0.0
        %968 = vmatpush1.msra.mxu0 0.0
        %969 = vmatprep.mubr.f32.mxu0 0.0
        %970 = vmatmul.mubr.f32.gmra.mrb[0].mxu0 %v900
        %v971 = vpop.f32.mrb[0].mxu0
        %v972 = vadd.f32 0.0, %v971
        %v973 = vpop.f32.mrb[0].mxu0
        %974 = vmatprep.mubr.f32.mxu0 0.0
        %975 = vmatmul.mubr.f32.gmra.mrb[0].mxu0 %v903
        %v976 = vpop.f32.mrb[0].mxu0
        %v977 = vadd.f32 0.0, %v976
        %v978 = vpop.f32.mrb[0].mxu0
        %979 = vdwg.mxu0
        %v980 = vadd.f32 %v793, %v897
        %v981 = vadd.f32 %v794, %v898
        %v982 = vadd.f32 %v980, %v972
        %v983 = vadd.f32 %v981, %v977
        %984 = vmatprep.subr.mxu0 %v550
        %985 = vmatpush1.msra.mxu0 %v549
        %986 = vmatprep.subr.mxu0 %v554
        %987 = vmatpush1.msra.mxu0 %v553
        %988 = vmatprep.subr.mxu0 %v558
        %989 = vmatpush1.msra.mxu0 %v557
        %990 = vmatprep.subr.mxu0 %v562
        %991 = vmatpush1.msra.mxu0 %v561
        %992 = vmatprep.subr.mxu0 %v566
        %993 = vmatpush1.msra.mxu0 %v565
        %994 = vmatprep.subr.mxu0 %v570
        %995 = vmatpush1.msra.mxu0 %v569
        %996 = vmatprep.subr.mxu0 %v574
        %997 = vmatpush1.msra.mxu0 %v573
        %998 = vmatprep.subr.mxu0 %v578
        %999 = vmatpush1.msra.mxu0 %v577
        %1000 = vmatprep.subr.mxu0 %v582
        %1001 = vmatpush1.msra.mxu0 %v581
        %1002 = vmatprep.subr.mxu0 %v586
        %1003 = vmatpush1.msra.mxu0 %v585
        %1004 = vmatprep.subr.mxu0 %v590
        %1005 = vmatpush1.msra.mxu0 %v589
        %1006 = vmatprep.subr.mxu0 %v594
        %1007 = vmatpush1.msra.mxu0 %v593
        %1008 = vmatprep.subr.mxu0 %v598
        %1009 = vmatpush1.msra.mxu0 %v597
        %1010 = vmatprep.subr.mxu0 %v602
        %1011 = vmatpush1.msra.mxu0 %v601
        %1012 = vmatprep.subr.mxu0 %v606
        %1013 = vmatpush1.msra.mxu0 %v605
        %1014 = vmatprep.subr.mxu0 %v610
        %1015 = vmatpush1.msra.mxu0 %v609
        %1016 = vmatprep.subr.mxu0 0.0
        %1017 = vmatpush1.msra.mxu0 0.0
        %1018 = vmatprep.subr.mxu0 0.0
        %1019 = vmatpush1.msra.mxu0 0.0
        %1020 = vmatprep.subr.mxu0 0.0
        %1021 = vmatpush1.msra.mxu0 0.0
        %1022 = vmatprep.subr.mxu0 0.0
        %1023 = vmatpush1.msra.mxu0 0.0
        %1024 = vmatprep.subr.mxu0 0.0
        %1025 = vmatpush1.msra.mxu0 0.0
        %1026 = vmatprep.subr.mxu0 0.0
        %1027 = vmatpush1.msra.mxu0 0.0
        %1028 = vmatprep.subr.mxu0 0.0
        %1029 = vmatpush1.msra.mxu0 0.0
        %1030 = vmatprep.subr.mxu0 0.0
        %1031 = vmatpush1.msra.mxu0 0.0
        %1032 = vmatprep.subr.mxu0 0.0
        %1033 = vmatpush1.msra.mxu0 0.0
        %1034 = vmatprep.subr.mxu0 0.0
        %1035 = vmatpush1.msra.mxu0 0.0
        %1036 = vmatprep.subr.mxu0 0.0
        %1037 = vmatpush1.msra.mxu0 0.0
        %1038 = vmatprep.subr.mxu0 0.0
        %1039 = vmatpush1.msra.mxu0 0.0
        %1040 = vmatprep.subr.mxu0 0.0
        %1041 = vmatpush1.msra.mxu0 0.0
        %1042 = vmatprep.subr.mxu0 0.0
        %1043 = vmatpush1.msra.mxu0 0.0
        %1044 = vmatprep.subr.mxu0 0.0
        %1045 = vmatpush1.msra.mxu0 0.0
        %1046 = vmatprep.subr.mxu0 0.0
        %1047 = vmatpush1.msra.mxu0 0.0
        %1048 = vmatprep.mubr.f32.mxu0 0.0
        %1049 = vmatmul.mubr.f32.gmra.mrb[0].mxu0 %v982
        %v1050 = vpop.f32.mrb[0].mxu0
        %v1051 = vadd.f32 0.0, %v1050
        %v1052 = vpop.f32.mrb[0].mxu0
        %v1053 = vadd.f32 0.0, %v1052
        %1054 = vmatprep.mubr.f32.mxu0 0.0
        %1055 = vmatmul.mubr.f32.gmra.mrb[0].mxu0 %v983
        %v1056 = vpop.f32.mrb[0].mxu0
        %v1057 = vadd.f32 0.0, %v1056
        %v1058 = vpop.f32.mrb[0].mxu0
        %v1059 = vadd.f32 0.0, %v1058
        %1060 = vdwg.mxu0
        %1061 = vmatprep.subr.mxu0 %v552
        %1062 = vmatpush1.msra.mxu0 %v551
        %1063 = vmatprep.subr.mxu0 %v556
        %1064 = vmatpush1.msra.mxu0 %v555
        %1065 = vmatprep.subr.mxu0 %v560
        %1066 = vmatpush1.msra.mxu0 %v559
        %1067 = vmatprep.subr.mxu0 %v564
        %1068 = vmatpush1.msra.mxu0 %v563
        %1069 = vmatprep.subr.mxu0 %v568
        %1070 = vmatpush1.msra.mxu0 %v567
        %1071 = vmatprep.subr.mxu0 %v572
        %1072 = vmatpush1.msra.mxu0 %v571
        %1073 = vmatprep.subr.mxu0 %v576
        %1074 = vmatpush1.msra.mxu0 %v575
        %1075 = vmatprep.subr.mxu0 %v580
        %1076 = vmatpush1.msra.mxu0 %v579
        %1077 = vmatprep.subr.mxu0 %v584
        %1078 = vmatpush1.msra.mxu0 %v583
        %1079 = vmatprep.subr.mxu0 %v588
        %1080 = vmatpush1.msra.mxu0 %v587
        %1081 = vmatprep.subr.mxu0 %v592
        %1082 = vmatpush1.msra.mxu0 %v591
        %1083 = vmatprep.subr.mxu0 %v596
        %1084 = vmatpush1.msra.mxu0 %v595
        %1085 = vmatprep.subr.mxu0 %v600
        %1086 = vmatpush1.msra.mxu0 %v599
        %1087 = vmatprep.subr.mxu0 %v604
        %1088 = vmatpush1.msra.mxu0 %v603
        %1089 = vmatprep.subr.mxu0 %v608
        %1090 = vmatpush1.msra.mxu0 %v607
        %1091 = vmatprep.subr.mxu0 %v612
        %1092 = vmatpush1.msra.mxu0 %v611
        %1093 = vmatprep.subr.mxu0 0.0
        %1094 = vmatpush1.msra.mxu0 0.0
        %1095 = vmatprep.subr.mxu0 0.0
        %1096 = vmatpush1.msra.mxu0 0.0
        %1097 = vmatprep.subr.mxu0 0.0
        %1098 = vmatpush1.msra.mxu0 0.0
        %1099 = vmatprep.subr.mxu0 0.0
        %1100 = vmatpush1.msra.mxu0 0.0
        %1101 = vmatprep.subr.mxu0 0.0
        %1102 = vmatpush1.msra.mxu0 0.0
        %1103 = vmatprep.subr.mxu0 0.0
        %1104 = vmatpush1.msra.mxu0 0.0
        %1105 = vmatprep.subr.mxu0 0.0
        %1106 = vmatpush1.msra.mxu0 0.0
        %1107 = vmatprep.subr.mxu0 0.0
        %1108 = vmatpush1.msra.mxu0 0.0
        %1109 = vmatprep.subr.mxu0 0.0
        %1110 = vmatpush1.msra.mxu0 0.0
        %1111 = vmatprep.subr.mxu0 0.0
        %1112 = vmatpush1.msra.mxu0 0.0
        %1113 = vmatprep.subr.mxu0 0.0
        %1114 = vmatpush1.msra.mxu0 0.0
        %1115 = vmatprep.subr.mxu0 0.0
        %1116 = vmatpush1.msra.mxu0 0.0
        %1117 = vmatprep.subr.mxu0 0.0
        %1118 = vmatpush1.msra.mxu0 0.0
        %1119 = vmatprep.subr.mxu0 0.0
        %1120 = vmatpush1.msra.mxu0 0.0
        %1121 = vmatprep.subr.mxu0 0.0
        %1122 = vmatpush1.msra.mxu0 0.0
        %1123 = vmatprep.subr.mxu0 0.0
        %1124 = vmatpush1.msra.mxu0 0.0
        %1125 = vmatprep.mubr.f32.mxu0 0.0
        %1126 = vmatmul.mubr.f32.gmra.mrb[0].mxu0 %v982
        %v1127 = vpop.f32.mrb[0].mxu0
        %v1128 = vadd.f32 0.0, %v1127
        %v1129 = vpop.f32.mrb[0].mxu0
        %v1130 = vadd.f32 0.0, %v1129
        %1131 = vmatprep.mubr.f32.mxu0 0.0
        %1132 = vmatmul.mubr.f32.gmra.mrb[0].mxu0 %v983
        %v1133 = vpop.f32.mrb[0].mxu0
        %v1134 = vadd.f32 0.0, %v1133
        %v1135 = vpop.f32.mrb[0].mxu0
        %v1136 = vadd.f32 0.0, %v1135
        %1137 = vdwg.mxu0
        %v1138 = vadd.f32 %v1130, %v541
        %v1139 = vadd.f32 %v1136, %v547
        %v1140 = vxor.u32 %v1138, 2147483648
        %v1141 = vxor.u32 %v1139, 2147483648
        %v1142 = vmul.f32 %v1140, 1.442695
        %v1143 = vpow.pop %v1142
        %v1144 = vmul.f32 %v1141, 1.442695
        %v1145 = vpow.pop %v1144
        %v1146 = vadd.f32 %v1143, 1.0
        %v1147 = vadd.f32 %v1145, 1.0
        %v1148 = vrcp.pop %v1146
        %v1149 = vmul.f32 1.0, %v1148
        %v1150 = vrcp.pop %v1147
        %v1151 = vmul.f32 1.0, %v1150
        %v1152 = vadd.f32 %v1051, %v462
        %v1153 = vadd.f32 %v1057, %v468
        %1155 = vset.pattern.permute.xlu0 0
        %1156 = vperm.xlu0 %1155, %v1149
        %v1157 = vpop.permute.xlu0 %1156
        %1160 = vset.pattern.permute.xlu0 0
        %1161 = vperm.xlu0 %1160, %v1151
        %v1162 = vpop.permute.xlu0 %1161
        %v1164 = vmul.f32 %v1157, %v1152
        %v1165 = vmul.f32 %v1162, %v1153
        %v1166 = vadd.f32 %v1053, %v464
        %v1167 = vadd.f32 %v1059, %v470
        %1168 = vset.pattern.permute.xlu0 2
        %1169 = vperm.xlu0 %1168, %v1149
        %v1170 = vpop.permute.xlu0 %1169
        %1172 = vset.pattern.permute.xlu0 2
        %1173 = vperm.xlu0 %1172, %v1151
        %v1174 = vpop.permute.xlu0 %1173
        %v1176 = vmul.f32 %v1170, %v1166
        %v1177 = vmul.f32 %v1174, %v1167
        %1178 = vmatprep.subr.mxu0 0.0
        %1179 = vmatpush1.msra.mxu0 %v1128
        %1180 = vmatprep.subr.mxu0 0.0
        %1181 = vmatpush1.msra.mxu0 %v1134
        %1182 = vmatprep.subr.mxu0 0.0
        %1183 = vmatpush1.msra.mxu0 0.0
        %1184 = vmatprep.subr.mxu0 0.0
        %1185 = vmatpush1.msra.mxu0 0.0
        %1186 = vmatprep.subr.mxu0 0.0
        %1187 = vmatpush1.msra.mxu0 0.0
        %1188 = vmatprep.subr.mxu0 0.0
        %1189 = vmatpush1.msra.mxu0 0.0
        %1190 = vmatprep.subr.mxu0 0.0
        %1191 = vmatpush1.msra.mxu0 0.0
        %1192 = vmatprep.subr.mxu0 0.0
        %1193 = vmatpush1.msra.mxu0 0.0
        %1194 = vmatprep.subr.mxu0 0.0
        %1195 = vmatpush1.msra.mxu0 0.0
        %1196 = vmatprep.subr.mxu0 0.0
        %1197 = vmatpush1.msra.mxu0 0.0
        %1198 = vmatprep.subr.mxu0 0.0
        %1199 = vmatpush1.msra.mxu0 0.0
        %1200 = vmatprep.subr.mxu0 0.0
        %1201 = vmatpush1.msra.mxu0 0.0
        %1202 = vmatprep.subr.mxu0 0.0
        %1203 = vmatpush1.msra.mxu0 0.0
        %1204 = vmatprep.subr.mxu0 0.0
        %1205 = vmatpush1.msra.mxu0 0.0
        %1206 = vmatprep.subr.mxu0 0.0
        %1207 = vmatpush1.msra.mxu0 0.0
        %1208 = vmatprep.subr.mxu0 0.0
        %1209 = vmatpush1.msra.mxu0 0.0
        %1210 = vmatprep.subr.mxu0 0.0
        %1211 = vmatpush1.msra.mxu0 0.0
        %1212 = vmatprep.subr.mxu0 0.0
        %1213 = vmatpush1.msra.mxu0 0.0
        %1214 = vmatprep.subr.mxu0 0.0
        %1215 = vmatpush1.msra.mxu0 0.0
        %1216 = vmatprep.subr.mxu0 0.0
        %1217 = vmatpush1.msra.mxu0 0.0
        %1218 = vmatprep.subr.mxu0 0.0
        %1219 = vmatpush1.msra.mxu0 0.0
        %1220 = vmatprep.subr.mxu0 0.0
        %1221 = vmatpush1.msra.mxu0 0.0
        %1222 = vmatprep.subr.mxu0 0.0
        %1223 = vmatpush1.msra.mxu0 0.0
        %1224 = vmatprep.subr.mxu0 0.0
        %1225 = vmatpush1.msra.mxu0 0.0
        %1226 = vmatprep.subr.mxu0 0.0
        %1227 = vmatpush1.msra.mxu0 0.0
        %1228 = vmatprep.subr.mxu0 0.0
        %1229 = vmatpush1.msra.mxu0 0.0
        %1230 = vmatprep.subr.mxu0 0.0
        %1231 = vmatpush1.msra.mxu0 0.0
        %1232 = vmatprep.subr.mxu0 0.0
        %1233 = vmatpush1.msra.mxu0 0.0
        %1234 = vmatprep.subr.mxu0 0.0
        %1235 = vmatpush1.msra.mxu0 0.0
        %1236 = vmatprep.subr.mxu0 0.0
        %1237 = vmatpush1.msra.mxu0 0.0
        %1238 = vmatprep.subr.mxu0 0.0
        %1239 = vmatpush1.msra.mxu0 0.0
        %1240 = vmatprep.subr.mxu0 0.0
        %1241 = vmatpush1.msra.mxu0 0.0
        %1242 = vmatprep.mubr.f32.mxu0 0.0
        %1243 = vmatmul.mubr.f32.gmra.mrb[0].mxu0 %v809
        %v1244 = vpop.f32.mrb[0].mxu0
        %v1245 = vadd.f32 %v539, %v1244
        %v1246 = vpop.f32.mrb[0].mxu0
        %1247 = vmatprep.mubr.f32.mxu0 0.0
        %1248 = vmatmul.mubr.f32.gmra.mrb[0].mxu0 %v812
        %v1249 = vpop.f32.mrb[0].mxu0
        %v1250 = vadd.f32 %v545, %v1249
        %v1251 = vpop.f32.mrb[0].mxu0
        %1252 = vdwg.mxu0
        %1253 = vset.pattern.permute.xlu0 1
        %1254 = vperm.xlu0 %1253, %v1149
        %v1255 = vpop.permute.xlu0 %1254
        %1257 = vset.pattern.permute.xlu0 1
        %1258 = vperm.xlu0 %1257, %v1151
        %v1259 = vpop.permute.xlu0 %1258
        %v1261 = vmul.f32 %v1255, %v1245
        %v1262 = vmul.f32 %v1259, %v1250
        %1263 = vmatprep.subr.mxu0 0.0
        %1264 = vmatpush1.msra.mxu0 %v1176
        %1265 = vmatprep.subr.mxu0 0.0
        %1266 = vmatpush1.msra.mxu0 %v1177
        %1267 = vmatprep.subr.mxu0 0.0
        %1268 = vmatpush1.msra.mxu0 0.0
        %1269 = vmatprep.subr.mxu0 0.0
        %1270 = vmatpush1.msra.mxu0 0.0
        %1271 = vmatprep.subr.mxu0 0.0
        %1272 = vmatpush1.msra.mxu0 0.0
        %1273 = vmatprep.subr.mxu0 0.0
        %1274 = vmatpush1.msra.mxu0 0.0
        %1275 = vmatprep.subr.mxu0 0.0
        %1276 = vmatpush1.msra.mxu0 0.0
        %1277 = vmatprep.subr.mxu0 0.0
        %1278 = vmatpush1.msra.mxu0 0.0
        %1279 = vmatprep.subr.mxu0 0.0
        %1280 = vmatpush1.msra.mxu0 0.0
        %1281 = vmatprep.subr.mxu0 0.0
        %1282 = vmatpush1.msra.mxu0 0.0
        %1283 = vmatprep.subr.mxu0 0.0
        %1284 = vmatpush1.msra.mxu0 0.0
        %1285 = vmatprep.subr.mxu0 0.0
        %1286 = vmatpush1.msra.mxu0 0.0
        %1287 = vmatprep.subr.mxu0 0.0
        %1288 = vmatpush1.msra.mxu0 0.0
        %1289 = vmatprep.subr.mxu0 0.0
        %1290 = vmatpush1.msra.mxu0 0.0
        %1291 = vmatprep.subr.mxu0 0.0
        %1292 = vmatpush1.msra.mxu0 0.0
        %1293 = vmatprep.subr.mxu0 0.0
        %1294 = vmatpush1.msra.mxu0 0.0
        %1295 = vmatprep.subr.mxu0 0.0
        %1296 = vmatpush1.msra.mxu0 0.0
        %1297 = vmatprep.subr.mxu0 0.0
        %1298 = vmatpush1.msra.mxu0 0.0
        %1299 = vmatprep.subr.mxu0 0.0
        %1300 = vmatpush1.msra.mxu0 0.0
        %1301 = vmatprep.subr.mxu0 0.0
        %1302 = vmatpush1.msra.mxu0 0.0
        %1303 = vmatprep.subr.mxu0 0.0
        %1304 = vmatpush1.msra.mxu0 0.0
        %1305 = vmatprep.subr.mxu0 0.0
        %1306 = vmatpush1.msra.mxu0 0.0
        %1307 = vmatprep.subr.mxu0 0.0
        %1308 = vmatpush1.msra.mxu0 0.0
        %1309 = vmatprep.subr.mxu0 0.0
        %1310 = vmatpush1.msra.mxu0 0.0
        %1311 = vmatprep.subr.mxu0 0.0
        %1312 = vmatpush1.msra.mxu0 0.0
        %1313 = vmatprep.subr.mxu0 0.0
        %1314 = vmatpush1.msra.mxu0 0.0
        %1315 = vmatprep.subr.mxu0 0.0
        %1316 = vmatpush1.msra.mxu0 0.0
        %1317 = vmatprep.subr.mxu0 0.0
        %1318 = vmatpush1.msra.mxu0 0.0
        %1319 = vmatprep.subr.mxu0 0.0
        %1320 = vmatpush1.msra.mxu0 0.0
        %1321 = vmatprep.subr.mxu0 0.0
        %1322 = vmatpush1.msra.mxu0 0.0
        %1323 = vmatprep.subr.mxu0 0.0
        %1324 = vmatpush1.msra.mxu0 0.0
        %1325 = vmatprep.subr.mxu0 0.0
        %1326 = vmatpush1.msra.mxu0 0.0
        %1327 = vmatprep.mubr.f32.mxu0 0.0
        %1328 = vmatmul.mubr.f32.gmra.mrb[0].mxu0 %v900
        %v1329 = vpop.f32.mrb[0].mxu0
        %v1330 = vadd.f32 0.0, %v1329
        %v1331 = vpop.f32.mrb[0].mxu0
        %1332 = vmatprep.mubr.f32.mxu0 0.0
        %1333 = vmatmul.mubr.f32.gmra.mrb[0].mxu0 %v903
        %v1334 = vpop.f32.mrb[0].mxu0
        %v1335 = vadd.f32 0.0, %v1334
        %v1336 = vpop.f32.mrb[0].mxu0
        %1337 = vdwg.mxu0
        %v1338 = vadd.f32 %v1164, %v1261
        %v1339 = vadd.f32 %v1165, %v1262
        %v1340 = vadd.f32 %v1338, %v1330
        %v1341 = vadd.f32 %v1339, %v1335
        %v1342 = vcvt.s32.f32 %v289
        %v1343 = vcvt.s32.f32 %v290
        %1345 = vset.pattern.permute.xlu0 2
        %1346 = vperm.xlu0 %1345, %v1342
        %v1347 = vpop.permute.xlu0 %1346
        %1350 = vset.pattern.permute.xlu0 2
        %1351 = vperm.xlu0 %1350, %v1343
        %v1352 = vpop.permute.xlu0 %1351
        %v1354 = vmul.f32 %v1340, %v1347
        %v1355 = vmul.f32 %v1341, %v1352
        %1356 = vst [vmem:[%s273] sm:$0xff] %v1354
        %1357 = vst [vmem:[%s273 + $0x8] sm:$0xff] %v1355
        %s1358 = sand.u32 %s149, 1
        %s1359 = scalar_lea.sflag [#allocation4], %s1358
        %s1360 = sand.u32 %s149, 1
        %s1361 = smul.addr %s1360, 16
        %s1362 = scalar_lea.vmem [#allocation7], %s1361
        // Predicated region
        $region49: #{tpu_custom_call.1} parent=39 // pred_check
          %p1363 = pneg %p159
        $region50: #{tpu_custom_call.1} parent=39 // pred_check_branch
          %1365 = sbr.rel (%p1363) target = $region52
        $region51: #{tpu_custom_call.1} parent=39 // pred_region
          %s1367 = ssub.s32 256, 256
          %1368 = vsyncadd %s1359, %s1367
          %s1369 = smul.addr %s21, 2
          %s1370 = smul.addr %s1369, 128
          %s1371 = scalar_lea.hbm %s5, %s1370
          %s1372 = sshll.u32 %s1362, 4
          %s1373 = int_to_ptr.vmem [resolvable:$true] %s1372
          %1378 = dma.vmem_to_hbm [thread:$0]  %s1373, 256, %s1371, %s1359, 128, 128, 8
        $region52: #{tpu_custom_call.1} parent=39 // pred_fallthru
          _
      $region40: #{tpu_custom_call.1} parent=5 // pred_fallthru
        _
      %p1379 = scmp.le.s32.totalorder 2, %s16
      // Predicated region
      $region53: #{tpu_custom_call.1} parent=5 // pred_check
        %p1380 = pneg %p1379
      $region54: #{tpu_custom_call.1} parent=5 // pred_check_branch
        %1382 = sbr.rel (%p1380) target = $region56
      $region55: #{tpu_custom_call.1} parent=5 // pred_region
        %s1383 = ssub.s32 %s16, 2
        // Predicated region
        $region57: #{tpu_custom_call.1} parent=55 // pred_check
          %p1384 = pneg %p165
        $region58: #{tpu_custom_call.1} parent=55 // pred_check_branch
          %1386 = sbr.rel (%p1384) target = $region60
        $region59: #{tpu_custom_call.1} parent=55 // pred_region
          %s1387 = sand.u32 %s150, 1
          %s1388 = scalar_lea.sflag [#allocation4], %s1387
          %s1389 = sand.u32 %s150, 1
          %s1390 = smul.addr %s1389, 16
          %s1391 = scalar_lea.vmem [#allocation7], %s1390
          %1392 = dma.done %s1388, 256
        $region60: #{tpu_custom_call.1} parent=55 // pred_fallthru
          _
      $region56: #{tpu_custom_call.1} parent=5 // pred_fallthru
        _
    $region6: #{tpu_custom_call.1} parent=1 // loop_footer
      %s20 = sadd.s32 1, %s16
    $region7: #{tpu_custom_call.1} parent=1 // loop_footer_branch
      %15 = sbr.rel target = $region3
    $region8: #{tpu_custom_call.1} parent=1 // loop_exit
      _
    %1393 = vsyncpa [#allocation3], 1
    %s1394 = scalar_lea.sflag [#allocation3], 1
    %1395 = vsyncpa %s1394, 1
    %1396 = vsyncpa [#allocation6], 1
    %1397 = vsyncpa [#allocation4], 1
    %s1398 = scalar_lea.sflag [#allocation4], 1
    %1399 = vsyncpa %s1398, 1

</llo_original>
